<compile_context>
chip_gen: v5e
topology: v5e:2x2
jax: 0.10.0
libtpu: 0.0.40
codegen_flags: <defaults>
</compile_context>

<pallas_src>
import math

import jax
import jax.numpy as jnp
from jax.experimental import pallas as pl
from jax.experimental.pallas import tpu as pltpu

_INV_SQRT2 = 1.0 / math.sqrt(2.0)
_SQRT_2_OVER_PI = math.sqrt(2.0 / math.pi)


def _round_up(v, m):
    return ((v + m - 1) // m) * m


def _gelu_f32(y, use_tanh=False):
    if use_tanh:
        # tanh approx runs on the EUP (own bundle slot); optional for v6e/v7x
        # when the ~15-op erf VALU polynomial becomes the binding unit.
        return 0.5 * y * (1.0 + jnp.tanh(_SQRT_2_OVER_PI * (y + 0.044715 * y * y * y)))
    # torch.nn.GELU default: 0.5 * y * (1 + erf(y / sqrt(2)))
    return 0.5 * y * (1.0 + jax.lax.erf(y * _INV_SQRT2))


def _vmem_budget_bytes():
    """Per-generation VMEM cap with ~25% headroom for compiler scratch."""
    try:
        cap = int(pltpu.get_tpu_info().vmem_capacity_bytes)
    except Exception:
        cap = 64 * 2 ** 20          # conservative (v7x-sized) if query unavailable
    return int(cap * 0.75)          # ~48 MiB on v7x, ~96 MiB on v5e/v6e


def _fused_vmem_needed(tm, k_in, padded_params, weight_buffers):
    """Estimate VMEM bytes for the fully-fused path (weights resident)."""
    w_bytes = sum(w.size * w.dtype.itemsize + b.size * b.dtype.itemsize
                  for w, b in padded_params)
    max_np = max(w.shape[1] for w, _ in padded_params)
    np_last = padded_params[-1][0].shape[1]
    x_bytes = 2 * tm * k_in * 4            # double-buffered f32 input tile
    out_bytes = 2 * tm * np_last * 4       # double-buffered f32 output tile
    inter = tm * max_np * (4 + 4 + 2)      # y (f32) + g (f32) + recast h (bf16)
    return weight_buffers * w_bytes + x_bytes + out_bytes + inter


# ---------------------------------------------------------------------------
# Fully fused path: every weight/bias is a VMEM-resident constant-index block,
# the activation never round-trips through HBM between layers.
# ---------------------------------------------------------------------------
def _make_fused_mlp_kernel(num_layers, use_tanh_gelu):
    """Kernel refs: (x, w0, b0, w1, b1, ..., out)."""

    def kernel(*refs):
        x_ref = refs[0]
        o_ref = refs[1 + 2 * num_layers]
        # Cast to bf16 inside the kernel (no wrapper-side pad/cast HBM pass).
        h = x_ref[...].astype(jnp.bfloat16)
        for l in range(num_layers):                       # unrolled at trace time
            w_ref = refs[1 + 2 * l]
            b_ref = refs[2 + 2 * l]
            y = jnp.dot(h, w_ref[...],
                        preferred_element_type=jnp.float32) + b_ref[...]
            g = _gelu_f32(y, use_tanh_gelu)               # f32 on VPU/EUP
            if l + 1 < num_layers:
                h = g.astype(jnp.bfloat16)                # bf16 feed for next MXU
            else:
                o_ref[...] = g.astype(o_ref.dtype)

    return kernel


def _fused_forward(x, padded_params, out_features, tm_eff, vmem_limit,
                   use_tanh_gelu):
    M, K = x.shape
    num_layers = len(padded_params)
    np_last = padded_params[-1][0].shape[1]

    if M <= tm_eff:
        # Small-M fast path: one grid step, block == full rows, no row padding.
        tm_eff = M
        mp = M
        x_in = x
    else:
        mp = _round_up(M, tm_eff)
        x_in = jnp.pad(x, ((0, mp - M), (0, 0))) if mp != M else x
    grid = (mp // tm_eff,)

    flat_params = []
    for w_p, b_p in padded_params:
        flat_params.extend([w_p, b_p])
    out_spec = pl.BlockSpec((tm_eff, np_last), lambda i: (i, 0))

    def build_in_specs(single_buffer_weights):
        specs = [pl.BlockSpec((tm_eff, K), lambda i: (i, 0))]
        kw = {"pipeline_mode": pl.Buffered(1)} if single_buffer_weights else {}
        for w_p, b_p in padded_params:
            specs.append(pl.BlockSpec(w_p.shape, lambda i: (0, 0), **kw))
            specs.append(pl.BlockSpec(b_p.shape, lambda i: (0, 0), **kw))
        return specs

    def run(single_buffer_weights):
        return pl.pallas_call(
            _make_fused_mlp_kernel(num_layers, use_tanh_gelu),
            out_shape=jax.ShapeDtypeStruct((mp, np_last), jnp.float32),
            grid_spec=pltpu.PrefetchScalarGridSpec(
                num_scalar_prefetch=0,
                grid=grid,
                in_specs=build_in_specs(single_buffer_weights),
                out_specs=out_spec,
            ),
            compiler_params=pltpu.CompilerParams(
                dimension_semantics=("parallel",),
                vmem_limit_bytes=vmem_limit,
            ),
        )(x_in, *flat_params)

    try:
        # Single-buffer the constant-index weight/bias blocks (halves their VMEM).
        out_p = run(True)
    except Exception:
        # Older Pallas without BlockSpec.pipeline_mode: default double-buffering.
        out_p = run(False)

    # TODO(synk): consumers that accept the lane-padded width (and/or bf16) can
    # skip this slice and avoid one extra HBM read+write of the output.
    return out_p[:M, :out_features]


# ---------------------------------------------------------------------------
# Fallback path (weights too large for VMEM residency): per-layer tiled
# matmul + bias + GELU with an f32 accumulator over a K grid axis.
# ---------------------------------------------------------------------------
def _make_layer_kernel(use_tanh_gelu):
    def kernel(x_ref, w_ref, b_ref, o_ref, acc_ref):
        @pl.when(pl.program_id(2) == 0)
        def _():
            acc_ref[...] = jnp.zeros_like(acc_ref)

        acc_ref[...] += jnp.dot(x_ref[...], w_ref[...],
                                preferred_element_type=jnp.float32)

        @pl.when(pl.program_id(2) == pl.num_programs(2) - 1)
        def _():
            y = acc_ref[...] + b_ref[...]
            o_ref[...] = _gelu_f32(y, use_tanh_gelu).astype(o_ref.dtype)

    return kernel


def _pick_tile(dim, candidates=(512, 256, 128)):
    for c in candidates:
        if dim % c == 0:
            return c
    return dim


def _tiled_forward(x, padded_params, out_features, vmem_limit, use_tanh_gelu):
    M, K = x.shape
    tm = min(256, _round_up(M, 8))
    mp = _round_up(M, tm)
    k0p = _round_up(K, 128)
    h = jnp.pad(x, ((0, mp - M), (0, k0p - K))).astype(jnp.bfloat16)
    num_layers = len(padded_params)

    for l, (w_p, b_p) in enumerate(padded_params):
        kw, nw = w_p.shape
        kp = _round_up(kw, 128)
        if kp != kw:  # layer-0 weight keeps the true (unpadded) input dim
            w_p = jnp.pad(w_p, ((0, kp - kw), (0, 0)))
        tk = _pick_tile(kp)
        tn = _pick_tile(nw)
        last = (l == num_layers - 1)
        out_dtype = jnp.float32 if last else jnp.bfloat16
        h = pl.pallas_call(
            _make_layer_kernel(use_tanh_gelu),
            out_shape=jax.ShapeDtypeStruct((mp, nw), out_dtype),
            grid_spec=pltpu.PrefetchScalarGridSpec(
                num_scalar_prefetch=0,
                grid=(mp // tm, nw // tn, kp // tk),
                in_specs=[pl.BlockSpec((tm, tk), lambda i, j, k: (i, k)),
                          pl.BlockSpec((tk, tn), lambda i, j, k: (k, j)),
                          pl.BlockSpec((1, tn), lambda i, j, k: (0, j))],
                out_specs=pl.BlockSpec((tm, tn), lambda i, j, k: (i, j)),
                scratch_shapes=[pltpu.VMEM((tm, tn), jnp.float32)],
            ),
            compiler_params=pltpu.CompilerParams(
                dimension_semantics=("parallel", "parallel", "arbitrary"),
                vmem_limit_bytes=vmem_limit,
            ),
        )(h, w_p, b_p)

    return h[:M, :out_features]


# ---------------------------------------------------------------------------
# Public forward
# ---------------------------------------------------------------------------
def mlp_forward(x, padded_params, out_features, *, tm=None, use_tanh_gelu=False):
    """Run the full Linear+GELU chain.

    x:             (M, K) float32, unpadded (K = word_embedding_dim).
    padded_params: list of (w_bf16, b_f32); layer-0 weight has unpadded input
                   dim, all output dims (and later input dims) padded to 128.
    out_features:  true (unpadded) width of the final layer.
    """
    budget = _vmem_budget_bytes()
    if tm is None:
        # Bigger row tiles where VMEM allows it (v5e/v6e: 128 MiB -> 512 rows),
        # 256 on v7x (64 MiB VMEM per TensorCore).
        tm = 512 if budget >= 80 * 2 ** 20 else 256

    M, K = x.shape
    tm_eff = M if M <= tm else tm
    # Shrink the row tile before giving up on the fused path.
    while tm_eff > 64 and _fused_vmem_needed(tm_eff, K, padded_params, 2) > budget:
        tm_eff = max(64, tm_eff // 2)

    if _fused_vmem_needed(tm_eff, K, padded_params, 1) <= budget:
        return _fused_forward(x, padded_params, out_features, tm_eff, budget,
                              use_tanh_gelu)
    # Resident weights don't fit (e.g. wide layers on v7x): tile per layer.
    return _tiled_forward(x, padded_params, out_features, budget, use_tanh_gelu)


def xavier_normal(key, fan_in, fan_out, dtype=jnp.float32):
    # nn.init.xavier_normal_: std = sqrt(2 / (fan_in + fan_out))
    std = math.sqrt(2.0 / (fan_in + fan_out))
    return (std * jax.random.normal(key, (fan_in, fan_out))).astype(dtype)


class MLPLayersPallas:
    """JAX/Pallas re-implementation of MLP_Layers.forward (eval mode)."""

    def __init__(self, word_embedding_dim, item_embedding_dim, layers, drop_rate,
                 key=jax.random.PRNGKey(0)):
        assert layers[0] == item_embedding_dim, \
            "layers[0] must equal item_embedding_dim for the torch module to be valid"
        self.layers = list(layers)
        self.out_dim = layers[-1]

        # Layer dims of the full chain: fc then the mlp Linear layers.
        dims = [word_embedding_dim, item_embedding_dim] + list(layers[1:])
        keys = jax.random.split(key, len(dims) - 1)

        self.ref_params = []      # unpadded f32 (reference / export)
        self.padded_params = []   # kernel params (bf16 W, f32 b), lane-padded outs
        for idx, (din, dout) in enumerate(zip(dims[:-1], dims[1:])):
            w = xavier_normal(keys[idx], din, dout)     # stored as (in, out)
            b = jnp.zeros((dout,), jnp.float32)
            self.ref_params.append((w, b))
            doutp = _round_up(dout, 128)
            # Layer 0 keeps its true input dim (x is fed unpadded and cast
            # in-kernel); later layers' input dims match the previous padded out.
            dinp = din if idx == 0 else _round_up(din, 128)
            w_p = (jnp.zeros((dinp, doutp), jnp.float32)
                   .at[:din, :dout].set(w)).astype(jnp.bfloat16)
            b_p = jnp.zeros((1, doutp), jnp.float32).at[:, :dout].set(b)
            self.padded_params.append((w_p, b_p))
        # TODO(synk): Dropout is identity here (inference); training-mode dropout
        # would need pltpu.prng_seed/prng_random_bits + masking inside the kernel.

    def __call__(self, sample_items):
        # sample_items: (M, word_embedding_dim) float32
        return mlp_forward(sample_items, self.padded_params, self.out_dim)


if __name__ == "__main__":
    word_dim = 32
    item_dim = 16
    layers = [16, 32, 16]      # layers[0] == item_embedding_dim
    drop_rate = 0.1
    M = 16                     # number of token/item rows (e.g. batch*seq)

    key = jax.random.PRNGKey(0)
    k_x, k_p, k_x2 = jax.random.split(key, 3)
    x = jax.random.normal(k_x, (M, word_dim), dtype=jnp.float32)

    model = MLPLayersPallas(word_dim, item_dim, layers, drop_rate, key=k_p)

    # Reference 1: same math as the kernel (bf16 MXU inputs, f32 accumulation).
    def ref_bf16(xin):
        h = xin
        for w, b in model.ref_params:
            y = jnp.dot(h.astype(jnp.bfloat16), w.astype(jnp.bfloat16),
                        preferred_element_type=jnp.float32) + b
            h = _gelu_f32(y)
        return h

    # Reference 2: pure-f32 torch-semantics forward (loose tolerance vs bf16 MXU).
    def ref_f32(xin):
        h = xin
        for w, b in model.ref_params:
            h = _gelu_f32(h @ w + b)
        return h

    # --- Fused path, small-M fast path (single grid step) ---
    out = jax.block_until_ready(model(x))
    assert out.shape == (M, layers[-1])
    assert jnp.allclose(out, ref_bf16(x), atol=1e-3, rtol=1e-3), \
        "fused: mismatch vs bf16 reference"
    assert jnp.allclose(out, ref_f32(x), atol=5e-2, rtol=5e-2), \
        "fused: mismatch vs f32 reference"

    # --- Fused path, multi-step grid (exercises row padding / pipelining) ---
    M2 = 600
    x2 = jax.random.normal(k_x2, (M2, word_dim), dtype=jnp.float32)
    out2 = jax.block_until_ready(model(x2))
    assert out2.shape == (M2, layers[-1])
    assert jnp.allclose(out2, ref_bf16(x2), atol=1e-3, rtol=1e-3), \
        "fused (multi-step): mismatch vs bf16 reference"

    # --- Forced fallback path (per-layer K/N tiled kernels) ---
    out_fb = jax.block_until_ready(
        _tiled_forward(x, model.padded_params, model.out_dim,
                       _vmem_budget_bytes(), False))
    assert out_fb.shape == (M, layers[-1])
    assert jnp.allclose(out_fb, ref_bf16(x), atol=1e-3, rtol=1e-3), \
        "fallback: mismatch vs bf16 reference"

    print("KERNEL_OK")
</pallas_src>

<mosaic_0001>
module attributes {stable_mosaic.version = 11 : i64} {
  func.func @kernel(%arg0: i32, %arg1: memref<16x32xf32, #tpu.memory_space<vmem>>, %arg2: memref<32x128xbf16, #tpu.memory_space<vmem>>, %arg3: memref<1x128xf32, #tpu.memory_space<vmem>>, %arg4: memref<128x128xbf16, #tpu.memory_space<vmem>>, %arg5: memref<1x128xf32, #tpu.memory_space<vmem>>, %arg6: memref<128x128xbf16, #tpu.memory_space<vmem>>, %arg7: memref<1x128xf32, #tpu.memory_space<vmem>>, %arg8: memref<16x128xf32, #tpu.memory_space<vmem>>) attributes {dimension_semantics = [#tpu.dimension_semantics<parallel>], iteration_bounds = array<i64: 1>, scalar_prefetch = 0 : i64, scratch_operands = 0 : i64, tpu.core_type = #tpu.core_type<tc>, window_params = [{transform_indices = @transform_0, window_bounds = array<i64: 16, 32>}, {pipeline_mode = #tpu.pipeline_mode<synchronous>, transform_indices = @transform_1, window_bounds = array<i64: 32, 128>}, {pipeline_mode = #tpu.pipeline_mode<synchronous>, transform_indices = @transform_2, window_bounds = array<i64: 1, 128>}, {pipeline_mode = #tpu.pipeline_mode<synchronous>, transform_indices = @transform_3, window_bounds = array<i64: 128, 128>}, {pipeline_mode = #tpu.pipeline_mode<synchronous>, transform_indices = @transform_4, window_bounds = array<i64: 1, 128>}, {pipeline_mode = #tpu.pipeline_mode<synchronous>, transform_indices = @transform_5, window_bounds = array<i64: 128, 128>}, {pipeline_mode = #tpu.pipeline_mode<synchronous>, transform_indices = @transform_6, window_bounds = array<i64: 1, 128>}, {transform_indices = @transform_7, window_bounds = array<i64: 16, 128>}]} {
    %c0 = arith.constant 0 : index
    %c0_0 = arith.constant 0 : index
    %0 = vector.load %arg1[%c0, %c0_0] : memref<16x32xf32, #tpu.memory_space<vmem>>, vector<16x32xf32>
    %1 = arith.truncf %0 : vector<16x32xf32> to vector<16x32xbf16>
    %c0_1 = arith.constant 0 : index
    %c0_2 = arith.constant 0 : index
    %2 = vector.load %arg2[%c0_1, %c0_2] : memref<32x128xbf16, #tpu.memory_space<vmem>>, vector<32x128xbf16>
    %cst = arith.constant dense<0.000000e+00> : vector<16x128xf32>
    %3 = tpu.matmul %1, %2, %cst {dimension_numbers = #tpu.dot_dimension_numbers<[1], [0], [0], [1], [0, 0, 1, 1], [], []>} : vector<16x32xbf16>, vector<32x128xbf16>, vector<16x128xf32> -> vector<16x128xf32>
    %c0_3 = arith.constant 0 : index
    %c0_4 = arith.constant 0 : index
    %4 = vector.load %arg3[%c0_3, %c0_4] : memref<1x128xf32, #tpu.memory_space<vmem>>, vector<1x128xf32>
    %5 = vector.broadcast %4 : vector<1x128xf32> to vector<16x128xf32>
    %6 = arith.addf %3, %5 : vector<16x128xf32>
    %cst_5 = arith.constant 5.000000e-01 : f32
    %7 = vector.broadcast %cst_5 : f32 to vector<16x128xf32>
    %8 = arith.mulf %7, %6 : vector<16x128xf32>
    %cst_6 = arith.constant 0.707106769 : f32
    %9 = vector.broadcast %cst_6 : f32 to vector<16x128xf32>
    %10 = arith.mulf %6, %9 : vector<16x128xf32>
    %11 = math.erf %10 : vector<16x128xf32>
    %cst_7 = arith.constant 1.000000e+00 : f32
    %12 = vector.broadcast %cst_7 : f32 to vector<16x128xf32>
    %13 = arith.addf %12, %11 : vector<16x128xf32>
    %14 = arith.mulf %8, %13 : vector<16x128xf32>
    %15 = arith.truncf %14 : vector<16x128xf32> to vector<16x128xbf16>
    %c0_8 = arith.constant 0 : index
    %c0_9 = arith.constant 0 : index
    %16 = vector.load %arg4[%c0_8, %c0_9] : memref<128x128xbf16, #tpu.memory_space<vmem>>, vector<128x128xbf16>
    %cst_10 = arith.constant dense<0.000000e+00> : vector<16x128xf32>
    %17 = tpu.matmul %15, %16, %cst_10 {dimension_numbers = #tpu.dot_dimension_numbers<[1], [0], [0], [1], [0, 0, 1, 1], [], []>} : vector<16x128xbf16>, vector<128x128xbf16>, vector<16x128xf32> -> vector<16x128xf32>
    %c0_11 = arith.constant 0 : index
    %c0_12 = arith.constant 0 : index
    %18 = vector.load %arg5[%c0_11, %c0_12] : memref<1x128xf32, #tpu.memory_space<vmem>>, vector<1x128xf32>
    %19 = vector.broadcast %18 : vector<1x128xf32> to vector<16x128xf32>
    %20 = arith.addf %17, %19 : vector<16x128xf32>
    %cst_13 = arith.constant 5.000000e-01 : f32
    %21 = vector.broadcast %cst_13 : f32 to vector<16x128xf32>
    %22 = arith.mulf %21, %20 : vector<16x128xf32>
    %cst_14 = arith.constant 0.707106769 : f32
    %23 = vector.broadcast %cst_14 : f32 to vector<16x128xf32>
    %24 = arith.mulf %20, %23 : vector<16x128xf32>
    %25 = math.erf %24 : vector<16x128xf32>
    %cst_15 = arith.constant 1.000000e+00 : f32
    %26 = vector.broadcast %cst_15 : f32 to vector<16x128xf32>
    %27 = arith.addf %26, %25 : vector<16x128xf32>
    %28 = arith.mulf %22, %27 : vector<16x128xf32>
    %29 = arith.truncf %28 : vector<16x128xf32> to vector<16x128xbf16>
    %c0_16 = arith.constant 0 : index
    %c0_17 = arith.constant 0 : index
    %30 = vector.load %arg6[%c0_16, %c0_17] : memref<128x128xbf16, #tpu.memory_space<vmem>>, vector<128x128xbf16>
    %cst_18 = arith.constant dense<0.000000e+00> : vector<16x128xf32>
    %31 = tpu.matmul %29, %30, %cst_18 {dimension_numbers = #tpu.dot_dimension_numbers<[1], [0], [0], [1], [0, 0, 1, 1], [], []>} : vector<16x128xbf16>, vector<128x128xbf16>, vector<16x128xf32> -> vector<16x128xf32>
    %c0_19 = arith.constant 0 : index
    %c0_20 = arith.constant 0 : index
    %32 = vector.load %arg7[%c0_19, %c0_20] : memref<1x128xf32, #tpu.memory_space<vmem>>, vector<1x128xf32>
    %33 = vector.broadcast %32 : vector<1x128xf32> to vector<16x128xf32>
    %34 = arith.addf %31, %33 : vector<16x128xf32>
    %cst_21 = arith.constant 5.000000e-01 : f32
    %35 = vector.broadcast %cst_21 : f32 to vector<16x128xf32>
    %36 = arith.mulf %35, %34 : vector<16x128xf32>
    %cst_22 = arith.constant 0.707106769 : f32
    %37 = vector.broadcast %cst_22 : f32 to vector<16x128xf32>
    %38 = arith.mulf %34, %37 : vector<16x128xf32>
    %39 = math.erf %38 : vector<16x128xf32>
    %cst_23 = arith.constant 1.000000e+00 : f32
    %40 = vector.broadcast %cst_23 : f32 to vector<16x128xf32>
    %41 = arith.addf %40, %39 : vector<16x128xf32>
    %42 = arith.mulf %36, %41 : vector<16x128xf32>
    %c0_24 = arith.constant 0 : index
    %c0_25 = arith.constant 0 : index
    %43 = vector.load %arg8[%c0_24, %c0_25] : memref<16x128xf32, #tpu.memory_space<vmem>>, vector<16x128xf32>
    tpu.vector_store %arg8[%c0_24, %c0_25], %42 {strides = array<i32>} : memref<16x128xf32, #tpu.memory_space<vmem>>, vector<16x128xf32>,
    return
  }
  func.func @transform_0(%arg0: i32) -> (i32, i32) {
    %c0_i32 = arith.constant 0 : i32
    %c0_i32_0 = arith.constant 0 : i32
    return %arg0, %c0_i32 : i32, i32
  }
  func.func @transform_1(%arg0: i32) -> (i32, i32) {
    %c0_i32 = arith.constant 0 : i32
    %c0_i32_0 = arith.constant 0 : i32
    %c0_i32_1 = arith.constant 0 : i32
    return %c0_i32, %c0_i32_0 : i32, i32
  }
  func.func @transform_2(%arg0: i32) -> (i32, i32) {
    %c0_i32 = arith.constant 0 : i32
    %c0_i32_0 = arith.constant 0 : i32
    %c0_i32_1 = arith.constant 0 : i32
    return %c0_i32, %c0_i32_0 : i32, i32
  }
  func.func @transform_3(%arg0: i32) -> (i32, i32) {
    %c0_i32 = arith.constant 0 : i32
    %c0_i32_0 = arith.constant 0 : i32
    %c0_i32_1 = arith.constant 0 : i32
    return %c0_i32, %c0_i32_0 : i32, i32
  }
  func.func @transform_4(%arg0: i32) -> (i32, i32) {
    %c0_i32 = arith.constant 0 : i32
    %c0_i32_0 = arith.constant 0 : i32
    %c0_i32_1 = arith.constant 0 : i32
    return %c0_i32, %c0_i32_0 : i32, i32
  }
  func.func @transform_5(%arg0: i32) -> (i32, i32) {
    %c0_i32 = arith.constant 0 : i32
    %c0_i32_0 = arith.constant 0 : i32
    %c0_i32_1 = arith.constant 0 : i32
    return %c0_i32, %c0_i32_0 : i32, i32
  }
  func.func @transform_6(%arg0: i32) -> (i32, i32) {
    %c0_i32 = arith.constant 0 : i32
    %c0_i32_0 = arith.constant 0 : i32
    %c0_i32_1 = arith.constant 0 : i32
    return %c0_i32, %c0_i32_0 : i32, i32
  }
  func.func @transform_7(%arg0: i32) -> (i32, i32) {
    %c0_i32 = arith.constant 0 : i32
    %c0_i32_0 = arith.constant 0 : i32
    return %arg0, %c0_i32 : i32, i32
  }
}

module attributes {stable_mosaic.version = 11 : i64} {
  func.func @kernel(%arg0: i32, %arg1: memref<16x32xf32, #tpu.memory_space<vmem>>, %arg2: memref<32x128xbf16, #tpu.memory_space<vmem>>, %arg3: memref<1x128xf32, #tpu.memory_space<vmem>>, %arg4: memref<128x128xbf16, #tpu.memory_space<vmem>>, %arg5: memref<1x128xf32, #tpu.memory_space<vmem>>, %arg6: memref<128x128xbf16, #tpu.memory_space<vmem>>, %arg7: memref<1x128xf32, #tpu.memory_space<vmem>>, %arg8: memref<16x128xf32, #tpu.memory_space<vmem>>) attributes {dimension_semantics = [#tpu.dimension_semantics<parallel>], iteration_bounds = array<i64: 1>, scalar_prefetch = 0 : i64, scratch_operands = 0 : i64, tpu.core_type = #tpu.core_type<tc>, window_params = [{transform_indices = @transform_0, window_bounds = array<i64: 16, 32>}, {pipeline_mode = #tpu.pipeline_mode<synchronous>, transform_indices = @transform_1, window_bounds = array<i64: 32, 128>}, {pipeline_mode = #tpu.pipeline_mode<synchronous>, transform_indices = @transform_2, window_bounds = array<i64: 1, 128>}, {pipeline_mode = #tpu.pipeline_mode<synchronous>, transform_indices = @transform_3, window_bounds = array<i64: 128, 128>}, {pipeline_mode = #tpu.pipeline_mode<synchronous>, transform_indices = @transform_4, window_bounds = array<i64: 1, 128>}, {pipeline_mode = #tpu.pipeline_mode<synchronous>, transform_indices = @transform_5, window_bounds = array<i64: 128, 128>}, {pipeline_mode = #tpu.pipeline_mode<synchronous>, transform_indices = @transform_6, window_bounds = array<i64: 1, 128>}, {transform_indices = @transform_7, window_bounds = array<i64: 16, 128>}]} {
    %c0 = arith.constant 0 : index
    %c0_0 = arith.constant 0 : index
    %0 = vector.load %arg1[%c0, %c0_0] : memref<16x32xf32, #tpu.memory_space<vmem>>, vector<16x32xf32>
    %1 = arith.truncf %0 : vector<16x32xf32> to vector<16x32xbf16>
    %c0_1 = arith.constant 0 : index
    %c0_2 = arith.constant 0 : index
    %2 = vector.load %arg2[%c0_1, %c0_2] : memref<32x128xbf16, #tpu.memory_space<vmem>>, vector<32x128xbf16>
    %cst = arith.constant dense<0.000000e+00> : vector<16x128xf32>
    %3 = tpu.matmul %1, %2, %cst {dimension_numbers = #tpu.dot_dimension_numbers<[1], [0], [0], [1], [0, 0, 1, 1], [], []>} : vector<16x32xbf16>, vector<32x128xbf16>, vector<16x128xf32> -> vector<16x128xf32>
    %c0_3 = arith.constant 0 : index
    %c0_4 = arith.constant 0 : index
    %4 = vector.load %arg3[%c0_3, %c0_4] : memref<1x128xf32, #tpu.memory_space<vmem>>, vector<1x128xf32>
    %5 = vector.broadcast %4 : vector<1x128xf32> to vector<16x128xf32>
    %6 = arith.addf %3, %5 : vector<16x128xf32>
    %cst_5 = arith.constant 5.000000e-01 : f32
    %7 = vector.broadcast %cst_5 : f32 to vector<16x128xf32>
    %8 = arith.mulf %7, %6 : vector<16x128xf32>
    %cst_6 = arith.constant 0.707106769 : f32
    %9 = vector.broadcast %cst_6 : f32 to vector<16x128xf32>
    %10 = arith.mulf %6, %9 : vector<16x128xf32>
    %11 = math.erf %10 : vector<16x128xf32>
    %cst_7 = arith.constant 1.000000e+00 : f32
    %12 = vector.broadcast %cst_7 : f32 to vector<16x128xf32>
    %13 = arith.addf %12, %11 : vector<16x128xf32>
    %14 = arith.mulf %8, %13 : vector<16x128xf32>
    %15 = arith.truncf %14 : vector<16x128xf32> to vector<16x128xbf16>
    %c0_8 = arith.constant 0 : index
    %c0_9 = arith.constant 0 : index
    %16 = vector.load %arg4[%c0_8, %c0_9] : memref<128x128xbf16, #tpu.memory_space<vmem>>, vector<128x128xbf16>
    %cst_10 = arith.constant dense<0.000000e+00> : vector<16x128xf32>
    %17 = tpu.matmul %15, %16, %cst_10 {dimension_numbers = #tpu.dot_dimension_numbers<[1], [0], [0], [1], [0, 0, 1, 1], [], []>} : vector<16x128xbf16>, vector<128x128xbf16>, vector<16x128xf32> -> vector<16x128xf32>
    %c0_11 = arith.constant 0 : index
    %c0_12 = arith.constant 0 : index
    %18 = vector.load %arg5[%c0_11, %c0_12] : memref<1x128xf32, #tpu.memory_space<vmem>>, vector<1x128xf32>
    %19 = vector.broadcast %18 : vector<1x128xf32> to vector<16x128xf32>
    %20 = arith.addf %17, %19 : vector<16x128xf32>
    %cst_13 = arith.constant 5.000000e-01 : f32
    %21 = vector.broadcast %cst_13 : f32 to vector<16x128xf32>
    %22 = arith.mulf %21, %20 : vector<16x128xf32>
    %cst_14 = arith.constant 0.707106769 : f32
    %23 = vector.broadcast %cst_14 : f32 to vector<16x128xf32>
    %24 = arith.mulf %20, %23 : vector<16x128xf32>
    %25 = math.erf %24 : vector<16x128xf32>
    %cst_15 = arith.constant 1.000000e+00 : f32
    %26 = vector.broadcast %cst_15 : f32 to vector<16x128xf32>
    %27 = arith.addf %26, %25 : vector<16x128xf32>
    %28 = arith.mulf %22, %27 : vector<16x128xf32>
    %29 = arith.truncf %28 : vector<16x128xf32> to vector<16x128xbf16>
    %c0_16 = arith.constant 0 : index
    %c0_17 = arith.constant 0 : index
    %30 = vector.load %arg6[%c0_16, %c0_17] : memref<128x128xbf16, #tpu.memory_space<vmem>>, vector<128x128xbf16>
    %cst_18 = arith.constant dense<0.000000e+00> : vector<16x128xf32>
    %31 = tpu.matmul %29, %30, %cst_18 {dimension_numbers = #tpu.dot_dimension_numbers<[1], [0], [0], [1], [0, 0, 1, 1], [], []>} : vector<16x128xbf16>, vector<128x128xbf16>, vector<16x128xf32> -> vector<16x128xf32>
    %c0_19 = arith.constant 0 : index
    %c0_20 = arith.constant 0 : index
    %32 = vector.load %arg7[%c0_19, %c0_20] : memref<1x128xf32, #tpu.memory_space<vmem>>, vector<1x128xf32>
    %33 = vector.broadcast %32 : vector<1x128xf32> to vector<16x128xf32>
    %34 = arith.addf %31, %33 : vector<16x128xf32>
    %cst_21 = arith.constant 5.000000e-01 : f32
    %35 = vector.broadcast %cst_21 : f32 to vector<16x128xf32>
    %36 = arith.mulf %35, %34 : vector<16x128xf32>
    %cst_22 = arith.constant 0.707106769 : f32
    %37 = vector.broadcast %cst_22 : f32 to vector<16x128xf32>
    %38 = arith.mulf %34, %37 : vector<16x128xf32>
    %39 = math.erf %38 : vector<16x128xf32>
    %cst_23 = arith.constant 1.000000e+00 : f32
    %40 = vector.broadcast %cst_23 : f32 to vector<16x128xf32>
    %41 = arith.addf %40, %39 : vector<16x128xf32>
    %42 = arith.mulf %36, %41 : vector<16x128xf32>
    %c0_24 = arith.constant 0 : index
    %c0_25 = arith.constant 0 : index
    %43 = vector.load %arg8[%c0_24, %c0_25] : memref<16x128xf32, #tpu.memory_space<vmem>>, vector<16x128xf32>
    tpu.vector_store %arg8[%c0_24, %c0_25], %42 {strides = array<i32>} : memref<16x128xf32, #tpu.memory_space<vmem>>, vector<16x128xf32>,
    return
  }
  func.func @transform_0(%arg0: i32) -> (i32, i32) {
    %c0_i32 = arith.constant 0 : i32
    %c0_i32_0 = arith.constant 0 : i32
    return %arg0, %c0_i32 : i32, i32
  }
  func.func @transform_1(%arg0: i32) -> (i32, i32) {
    %c0_i32 = arith.constant 0 : i32
    %c0_i32_0 = arith.constant 0 : i32
    %c0_i32_1 = arith.constant 0 : i32
    return %c0_i32, %c0_i32_0 : i32, i32
  }
  func.func @transform_2(%arg0: i32) -> (i32, i32) {
    %c0_i32 = arith.constant 0 : i32
    %c0_i32_0 = arith.constant 0 : i32
    %c0_i32_1 = arith.constant 0 : i32
    return %c0_i32, %c0_i32_0 : i32, i32
  }
  func.func @transform_3(%arg0: i32) -> (i32, i32) {
    %c0_i32 = arith.constant 0 : i32
    %c0_i32_0 = arith.constant 0 : i32
    %c0_i32_1 = arith.constant 0 : i32
    return %c0_i32, %c0_i32_0 : i32, i32
  }
  func.func @transform_4(%arg0: i32) -> (i32, i32) {
    %c0_i32 = arith.constant 0 : i32
    %c0_i32_0 = arith.constant 0 : i32
    %c0_i32_1 = arith.constant 0 : i32
    return %c0_i32, %c0_i32_0 : i32, i32
  }
  func.func @transform_5(%arg0: i32) -> (i32, i32) {
    %c0_i32 = arith.constant 0 : i32
    %c0_i32_0 = arith.constant 0 : i32
    %c0_i32_1 = arith.constant 0 : i32
    return %c0_i32, %c0_i32_0 : i32, i32
  }
  func.func @transform_6(%arg0: i32) -> (i32, i32) {
    %c0_i32 = arith.constant 0 : i32
    %c0_i32_0 = arith.constant 0 : i32
    %c0_i32_1 = arith.constant 0 : i32
    return %c0_i32, %c0_i32_0 : i32, i32
  }
  func.func @transform_7(%arg0: i32) -> (i32, i32) {
    %c0_i32 = arith.constant 0 : i32
    %c0_i32_0 = arith.constant 0 : i32
    return %arg0, %c0_i32 : i32, i32
  }
}

</mosaic_0001>

<llo_original>
// kernel: tpu_custom_call.1
$region0: #{tpu_custom_call.1}
  #allocation0 [shape = 'u32[]', space=smem, size = 0x4, offset = 0x4, fixed_abs, tag = 'smem constant byte address 0x4 - core index']
  #allocation1 [shape = 'u32[72,128]{1,0:T(1,128)}', space=vmem, size = 0x9000, scoped, tag = 'internal scratch']
  %s0 = inlined_call_operand.hbm [shape: f32[16,32], index: 0, kind: input, shape index: {}]
  %s1 = inlined_call_operand.hbm [shape: bf16[32,128], index: 1, kind: input, shape index: {}]
  %s2 = inlined_call_operand.vmem [shape: f32[1,128], index: 2, kind: input, shape index: {}]
  %s3 = inlined_call_operand.hbm [shape: bf16[128,128], index: 3, kind: input, shape index: {}]
  %s4 = inlined_call_operand.vmem [shape: f32[1,128], index: 4, kind: input, shape index: {}]
  %s5 = inlined_call_operand.hbm [shape: bf16[128,128], index: 5, kind: input, shape index: {}]
  %s6 = inlined_call_operand.vmem [shape: f32[1,128], index: 6, kind: input, shape index: {}]
  %s7 = inlined_call_operand.hbm [shape: f32[16,128], index: 7, kind: output, shape index: {}]
  %s8 = sld [smem:[#allocation0]]
  $region54: #{tpu_custom_call.1} parent=0
    _
  %s10 = ssub.s32 1, %s8
  %s11 = scalar_select 0, %s10, %s8
  $region1: #{tpu_custom_call.1} parent=0
    #allocation2 [shape = 'u8[8192]{0}', space=vmem, size = 0x2000, scoped, tag = 'input window, operand 0, single buffered']
    #allocation3 [shape = 's32[1]{0}', space=sflag, size = 0x4, scoped, tag = 'scoped memory for tpu_custom_call.1']
    #allocation4 [shape = 's32[1]{0}', space=sflag, size = 0x4, scoped, tag = 'scoped memory for tpu_custom_call.1']
    #allocation5 [shape = 'u8[8192]{0}', space=vmem, size = 0x2000, scoped, tag = 'input window, operand 1, single buffered']
    #allocation6 [shape = 's32[1]{0}', space=sflag, size = 0x4, scoped, tag = 'scoped memory for tpu_custom_call.1']
    #allocation7 [shape = 'u8[32768]{0}', space=vmem, size = 0x8000, scoped, tag = 'input window, operand 3, single buffered']
    #allocation8 [shape = 'u8[32768]{0}', space=vmem, size = 0x8000, scoped, tag = 'input window, operand 5, single buffered']
    #allocation9 [shape = 's32[1]{0}', space=sflag, size = 0x4, scoped, tag = 'scoped memory for tpu_custom_call.1']
    #allocation10 [shape = 'u8[8192]{0}', space=vmem, size = 0x2000, scoped, tag = 'output window, operand 0, single buffered']
    %12 = vsyncpa [#allocation3], 0
    %13 = vsyncpa [#allocation6], 0
    %14 = vsyncpa [#allocation9], 0
    %15 = vsyncpa [#allocation4], 0
    // Predicated region
    $region2: #{tpu_custom_call.1} parent=1 // pred_check
      _
    $region3: #{tpu_custom_call.1} parent=1 // pred_check_branch
      %17 = sbr.rel (0) target = $region5
    $region4: #{tpu_custom_call.1} parent=1 // pred_region
      %19 = vsyncadd [#allocation3], 0
      %s20 = sshll.u32 %s0, 4
      %s21 = int_to_ptr.hbm [resolvable:$true] %s20
      %s22 = sshll.u32 [#allocation2], 4
      %s23 = int_to_ptr.vmem [resolvable:$true] %s22
      %28 = dma.hbm_to_vmem [thread:$0]  %s21, 256, %s23, [#allocation3], 128, 128, 8
    $region5: #{tpu_custom_call.1} parent=1 // pred_fallthru
      _
    // Predicated region
    $region6: #{tpu_custom_call.1} parent=1 // pred_check
      _
    $region7: #{tpu_custom_call.1} parent=1 // pred_check_branch
      %30 = sbr.rel (0) target = $region9
    $region8: #{tpu_custom_call.1} parent=1 // pred_region
      %32 = vsyncadd [#allocation6], 0
      %s33 = sshll.u32 %s1, 4
      %s34 = int_to_ptr.hbm [resolvable:$true] %s33
      %s35 = sshll.u32 [#allocation5], 4
      %s36 = int_to_ptr.vmem [resolvable:$true] %s35
      %41 = dma.hbm_to_vmem [thread:$0]  %s34, 256, %s36, [#allocation6], 64, 64, 4
    $region9: #{tpu_custom_call.1} parent=1 // pred_fallthru
      _
    // Predicated region
    $region10: #{tpu_custom_call.1} parent=1 // pred_check
      _
    $region11: #{tpu_custom_call.1} parent=1 // pred_check_branch
      %43 = sbr.rel (0) target = $region13
    $region12: #{tpu_custom_call.1} parent=1 // pred_region
      _
    $region13: #{tpu_custom_call.1} parent=1 // pred_fallthru
      _
    // Predicated region
    $region14: #{tpu_custom_call.1} parent=1 // pred_check
      _
    $region15: #{tpu_custom_call.1} parent=1 // pred_check_branch
      %45 = sbr.rel (0) target = $region17
    $region16: #{tpu_custom_call.1} parent=1 // pred_region
      %47 = vsyncadd [#allocation6], 0
      %s48 = sshll.u32 %s3, 4
      %s49 = int_to_ptr.hbm [resolvable:$true] %s48
      %s50 = sshll.u32 [#allocation7], 4
      %s51 = int_to_ptr.vmem [resolvable:$true] %s50
      %56 = dma.hbm_to_vmem [thread:$0]  %s49, 1024, %s51, [#allocation6], 64, 64, 4
    $region17: #{tpu_custom_call.1} parent=1 // pred_fallthru
      _
    // Predicated region
    $region18: #{tpu_custom_call.1} parent=1 // pred_check
      _
    $region19: #{tpu_custom_call.1} parent=1 // pred_check_branch
      %58 = sbr.rel (0) target = $region21
    $region20: #{tpu_custom_call.1} parent=1 // pred_region
      _
    $region21: #{tpu_custom_call.1} parent=1 // pred_fallthru
      _
    // Predicated region
    $region22: #{tpu_custom_call.1} parent=1 // pred_check
      _
    $region23: #{tpu_custom_call.1} parent=1 // pred_check_branch
      %60 = sbr.rel (0) target = $region25
    $region24: #{tpu_custom_call.1} parent=1 // pred_region
      %62 = vsyncadd [#allocation9], 0
      %s63 = sshll.u32 %s5, 4
      %s64 = int_to_ptr.hbm [resolvable:$true] %s63
      %s65 = sshll.u32 [#allocation8], 4
      %s66 = int_to_ptr.vmem [resolvable:$true] %s65
      %71 = dma.hbm_to_vmem [thread:$0]  %s64, 1024, %s66, [#allocation9], 64, 64, 4
    $region25: #{tpu_custom_call.1} parent=1 // pred_fallthru
      _
    // Predicated region
    $region26: #{tpu_custom_call.1} parent=1 // pred_check
      _
    $region27: #{tpu_custom_call.1} parent=1 // pred_check_branch
      %73 = sbr.rel (0) target = $region29
    $region28: #{tpu_custom_call.1} parent=1 // pred_region
      _
    $region29: #{tpu_custom_call.1} parent=1 // pred_fallthru
      _
    // Predicated region
    $region30: #{tpu_custom_call.1} parent=1 // pred_check
      _
    $region31: #{tpu_custom_call.1} parent=1 // pred_check_branch
      %75 = sbr.rel (0) target = $region33
    $region32: #{tpu_custom_call.1} parent=1 // pred_region
      %77 = dma.done [#allocation3], 256
    $region33: #{tpu_custom_call.1} parent=1 // pred_fallthru
      _
    // Predicated region
    $region34: #{tpu_custom_call.1} parent=1 // pred_check
      _
    $region35: #{tpu_custom_call.1} parent=1 // pred_check_branch
      %79 = sbr.rel (0) target = $region37
    $region36: #{tpu_custom_call.1} parent=1 // pred_region
      %81 = dma.done [#allocation6], 256
    $region37: #{tpu_custom_call.1} parent=1 // pred_fallthru
      _
    // Predicated region
    $region38: #{tpu_custom_call.1} parent=1 // pred_check
      _
    $region39: #{tpu_custom_call.1} parent=1 // pred_check_branch
      %83 = sbr.rel (0) target = $region41
    $region40: #{tpu_custom_call.1} parent=1 // pred_region
      %85 = dma.done [#allocation6], 1024
    $region41: #{tpu_custom_call.1} parent=1 // pred_fallthru
      _
    // Predicated region
    $region42: #{tpu_custom_call.1} parent=1 // pred_check
      _
    $region43: #{tpu_custom_call.1} parent=1 // pred_check_branch
      %87 = sbr.rel (0) target = $region45
    $region44: #{tpu_custom_call.1} parent=1 // pred_region
      %89 = dma.done [#allocation9], 1024
    $region45: #{tpu_custom_call.1} parent=1 // pred_fallthru
      _
    %v91 = vld [vmem:[#allocation2] sm:$0xff]
    %v92 = vld [vmem:[#allocation2 + $0x8] sm:$0xff]
    %v93 = vpack.c.bf16 %v92, %v91
    %v94 = vld [vmem:[#allocation5] sm:$0xf]
    %v95 = vld [vmem:[#allocation5 + $0x4] sm:$0xf]
    %v96 = vld [vmem:[#allocation5 + $0x8] sm:$0xf]
    %v97 = vld [vmem:[#allocation5 + $0xc] sm:$0xf]
    %v98 = vld [vmem:[%s2] sm:$0x1]
    %v100 = vperm.slane %v98, 0
    %v106 = vunpack.c.l.b16 %v94
    %v107 = vunpack.c.l.b16 %v95
    %v108 = vunpack.c.l.b16 %v96
    %v109 = vunpack.c.l.b16 %v97
    %v110 = vpack.c.b16 %v107, %v106
    %v111 = vpack.c.b16 %v109, %v108
    %vm114 = vcmask 261120
    %v116 = vsel %vm114, %v93, 0
    %118 = vmatpush.bf16.msra.mxu0 0
    %119 = vmatpush.bf16.msra.mxu0 0
    %120 = vmatpush.bf16.msra.mxu0 0
    %121 = vmatpush.bf16.msra.mxu0 0
    %122 = vmatpush.bf16.msra.mxu0 0
    %123 = vmatpush.bf16.msra.mxu0 0
    %124 = vmatpush.bf16.msra.mxu0 %v111
    %125 = vmatpush.bf16.msra.mxu0 %v110
    %126 = vmatmul.bf16.gmra.mxu0 %v116
    %v127 = vpop.f32.mrf.mxu0
    %v128 = vadd.f32 %v100, %v127
    %v129 = vpop.f32.mrf.mxu0
    %v130 = vadd.f32 %v100, %v129
    %131 = vdwg.mxu0
    %v132 = vmul.f32 %v128, 0.5
    %v133 = vmul.f32 %v130, 0.5
    %v134 = vmul.f32 %v128, 0.70710677
    %v135 = vmul.f32 %v130, 0.70710677
    %v136 = vmul.f32 %v134, %v134
    %v137 = vmin.f32 16.0, %v136
    %v138 = vmul.f32 %v137, 2.1237322e-06
    %v139 = vadd.f32 %v138, 0.00028619796
    %v140 = vmul.f32 %v137, %v139
    %v141 = vadd.f32 %v140, 0.0036580483
    %v142 = vmul.f32 %v137, %v141
    %v143 = vadd.f32 %v142, 0.05243302
    %v144 = vmul.f32 %v137, %v143
    %v145 = vadd.f32 %v144, 0.18741608
    %v146 = vmul.f32 %v137, %v145
    %v147 = vadd.f32 %v146, 1.1283791
    %v148 = vmul.f32 %v134, %v147
    %v149 = vmul.f32 %v137, 3.8918573e-05
    %v150 = vadd.f32 %v149, 0.001143296
    %v151 = vmul.f32 %v137, %v150
    %v152 = vadd.f32 %v151, 0.014752088
    %v153 = vmul.f32 %v137, %v152
    %v154 = vadd.f32 %v153, 0.112945676
    %v155 = vmul.f32 %v137, %v154
    %v156 = vadd.f32 %v155, 0.4994258
    %v157 = vmul.f32 %v137, %v156
    %v158 = vadd.f32 %v157, 1.0
    %v159 = vrcp.pop %v158
    %v160 = vmul.f32 %v158, %v159
    %v161 = vsub.f32 1.0, %v160
    %v162 = vmul.f32 %v159, %v161
    %v163 = vadd.f32 %v159, %v162
    %vm164 = vweird.f32 %v158
    %vm165 = vweird.f32 %v159
    %vm166 = vmor %vm164, %vm165
    %v167 = vsel %vm166, %v159, %v163
    %v168 = vand.u32 2147483647, %v158
    %vm169 = vcmp.eq.f32.partialorder %v168, 8.507059e+37
    %v170 = vand.u32 %v158, 2147483648
    %v171 = vor.u32 1.1754944e-38, %v170
    %v172 = vsel %vm169, %v171, %v167
    %v173 = vmul.f32 %v148, %v172
    %v174 = vmin.f32 %v173, 1.0
    %v175 = vmax.f32 %v174, -1.0
    %v176 = vmul.f32 %v135, %v135
    %v177 = vmin.f32 16.0, %v176
    %v178 = vmul.f32 %v177, 2.1237322e-06
    %v179 = vadd.f32 %v178, 0.00028619796
    %v180 = vmul.f32 %v177, %v179
    %v181 = vadd.f32 %v180, 0.0036580483
    %v182 = vmul.f32 %v177, %v181
    %v183 = vadd.f32 %v182, 0.05243302
    %v184 = vmul.f32 %v177, %v183
    %v185 = vadd.f32 %v184, 0.18741608
    %v186 = vmul.f32 %v177, %v185
    %v187 = vadd.f32 %v186, 1.1283791
    %v188 = vmul.f32 %v135, %v187
    %v189 = vmul.f32 %v177, 3.8918573e-05
    %v190 = vadd.f32 %v189, 0.001143296
    %v191 = vmul.f32 %v177, %v190
    %v192 = vadd.f32 %v191, 0.014752088
    %v193 = vmul.f32 %v177, %v192
    %v194 = vadd.f32 %v193, 0.112945676
    %v195 = vmul.f32 %v177, %v194
    %v196 = vadd.f32 %v195, 0.4994258
    %v197 = vmul.f32 %v177, %v196
    %v198 = vadd.f32 %v197, 1.0
    %v199 = vrcp.pop %v198
    %v200 = vmul.f32 %v198, %v199
    %v201 = vsub.f32 1.0, %v200
    %v202 = vmul.f32 %v199, %v201
    %v203 = vadd.f32 %v199, %v202
    %vm204 = vweird.f32 %v198
    %vm205 = vweird.f32 %v199
    %vm206 = vmor %vm204, %vm205
    %v207 = vsel %vm206, %v199, %v203
    %v208 = vand.u32 2147483647, %v198
    %vm209 = vcmp.eq.f32.partialorder %v208, 8.507059e+37
    %v210 = vand.u32 %v198, 2147483648
    %v211 = vor.u32 1.1754944e-38, %v210
    %v212 = vsel %vm209, %v211, %v207
    %v213 = vmul.f32 %v188, %v212
    %v214 = vmin.f32 %v213, 1.0
    %v215 = vmax.f32 %v214, -1.0
    %v216 = vadd.f32 %v175, 1.0
    %v217 = vadd.f32 %v215, 1.0
    %v218 = vmul.f32 %v132, %v216
    %v219 = vmul.f32 %v133, %v217
    %v220 = vpack.c.bf16 %v219, %v218
    %v221 = vld [vmem:[#allocation7] sm:$0xf]
    %v222 = vld [vmem:[#allocation7 + $0x4] sm:$0xf]
    %v223 = vld [vmem:[#allocation7 + $0x8] sm:$0xf]
    %v224 = vld [vmem:[#allocation7 + $0xc] sm:$0xf]
    %v225 = vld [vmem:[#allocation7 + $0x10] sm:$0xf]
    %v226 = vld [vmem:[#allocation7 + $0x14] sm:$0xf]
    %v227 = vld [vmem:[#allocation7 + $0x18] sm:$0xf]
    %v228 = vld [vmem:[#allocation7 + $0x1c] sm:$0xf]
    %v229 = vld [vmem:[#allocation7 + $0x20] sm:$0xf]
    %v230 = vld [vmem:[#allocation7 + $0x24] sm:$0xf]
    %v231 = vld [vmem:[#allocation7 + $0x28] sm:$0xf]
    %v232 = vld [vmem:[#allocation7 + $0x2c] sm:$0xf]
    %v233 = vld [vmem:[#allocation7 + $0x30] sm:$0xf]
    %v234 = vld [vmem:[#allocation7 + $0x34] sm:$0xf]
    %v235 = vld [vmem:[#allocation7 + $0x38] sm:$0xf]
    %v236 = vld [vmem:[#allocation7 + $0x3c] sm:$0xf]
    %v237 = vld [vmem:[%s4] sm:$0x1]
    %v239 = vperm.slane %v237, 0
    %v257 = vunpack.c.l.b16 %v221
    %v258 = vunpack.c.l.b16 %v222
    %v259 = vunpack.c.l.b16 %v223
    %v260 = vunpack.c.l.b16 %v224
    %v261 = vunpack.c.l.b16 %v225
    %v262 = vunpack.c.l.b16 %v226
    %v263 = vunpack.c.l.b16 %v227
    %v264 = vunpack.c.l.b16 %v228
    %v265 = vunpack.c.l.b16 %v229
    %v266 = vunpack.c.l.b16 %v230
    %v267 = vunpack.c.l.b16 %v231
    %v268 = vunpack.c.l.b16 %v232
    %v269 = vunpack.c.l.b16 %v233
    %v270 = vunpack.c.l.b16 %v234
    %v271 = vunpack.c.l.b16 %v235
    %v272 = vunpack.c.l.b16 %v236
    %v273 = vpack.c.b16 %v258, %v257
    %v274 = vpack.c.b16 %v260, %v259
    %v275 = vpack.c.b16 %v262, %v261
    %v276 = vpack.c.b16 %v264, %v263
    %v277 = vpack.c.b16 %v266, %v265
    %v278 = vpack.c.b16 %v268, %v267
    %v279 = vpack.c.b16 %v270, %v269
    %v280 = vpack.c.b16 %v272, %v271
    %289 = vmatpush.bf16.msra.mxu0 %v280
    %290 = vmatpush.bf16.msra.mxu0 %v279
    %291 = vmatpush.bf16.msra.mxu0 %v278
    %292 = vmatpush.bf16.msra.mxu0 %v277
    %293 = vmatpush.bf16.msra.mxu0 %v276
    %294 = vmatpush.bf16.msra.mxu0 %v275
    %295 = vmatpush.bf16.msra.mxu0 %v274
    %296 = vmatpush.bf16.msra.mxu0 %v273
    %297 = vmatmul.bf16.gmra.mxu0 %v220
    %v298 = vpop.f32.mrf.mxu0
    %v299 = vadd.f32 %v239, %v298
    %v300 = vpop.f32.mrf.mxu0
    %v301 = vadd.f32 %v239, %v300
    %302 = vdwg.mxu0
    %v303 = vmul.f32 %v299, 0.5
    %v304 = vmul.f32 %v301, 0.5
    %v305 = vmul.f32 %v299, 0.70710677
    %v306 = vmul.f32 %v301, 0.70710677
    %v307 = vmul.f32 %v305, %v305
    %v308 = vmin.f32 16.0, %v307
    %v309 = vmul.f32 %v308, 2.1237322e-06
    %v310 = vadd.f32 %v309, 0.00028619796
    %v311 = vmul.f32 %v308, %v310
    %v312 = vadd.f32 %v311, 0.0036580483
    %v313 = vmul.f32 %v308, %v312
    %v314 = vadd.f32 %v313, 0.05243302
    %v315 = vmul.f32 %v308, %v314
    %v316 = vadd.f32 %v315, 0.18741608
    %v317 = vmul.f32 %v308, %v316
    %v318 = vadd.f32 %v317, 1.1283791
    %v319 = vmul.f32 %v305, %v318
    %v320 = vmul.f32 %v308, 3.8918573e-05
    %v321 = vadd.f32 %v320, 0.001143296
    %v322 = vmul.f32 %v308, %v321
    %v323 = vadd.f32 %v322, 0.014752088
    %v324 = vmul.f32 %v308, %v323
    %v325 = vadd.f32 %v324, 0.112945676
    %v326 = vmul.f32 %v308, %v325
    %v327 = vadd.f32 %v326, 0.4994258
    %v328 = vmul.f32 %v308, %v327
    %v329 = vadd.f32 %v328, 1.0
    %v330 = vrcp.pop %v329
    %v331 = vmul.f32 %v329, %v330
    %v332 = vsub.f32 1.0, %v331
    %v333 = vmul.f32 %v330, %v332
    %v334 = vadd.f32 %v330, %v333
    %vm335 = vweird.f32 %v329
    %vm336 = vweird.f32 %v330
    %vm337 = vmor %vm335, %vm336
    %v338 = vsel %vm337, %v330, %v334
    %v339 = vand.u32 2147483647, %v329
    %vm340 = vcmp.eq.f32.partialorder %v339, 8.507059e+37
    %v341 = vand.u32 %v329, 2147483648
    %v342 = vor.u32 1.1754944e-38, %v341
    %v343 = vsel %vm340, %v342, %v338
    %v344 = vmul.f32 %v319, %v343
    %v345 = vmin.f32 %v344, 1.0
    %v346 = vmax.f32 %v345, -1.0
    %v347 = vmul.f32 %v306, %v306
    %v348 = vmin.f32 16.0, %v347
    %v349 = vmul.f32 %v348, 2.1237322e-06
    %v350 = vadd.f32 %v349, 0.00028619796
    %v351 = vmul.f32 %v348, %v350
    %v352 = vadd.f32 %v351, 0.0036580483
    %v353 = vmul.f32 %v348, %v352
    %v354 = vadd.f32 %v353, 0.05243302
    %v355 = vmul.f32 %v348, %v354
    %v356 = vadd.f32 %v355, 0.18741608
    %v357 = vmul.f32 %v348, %v356
    %v358 = vadd.f32 %v357, 1.1283791
    %v359 = vmul.f32 %v306, %v358
    %v360 = vmul.f32 %v348, 3.8918573e-05
    %v361 = vadd.f32 %v360, 0.001143296
    %v362 = vmul.f32 %v348, %v361
    %v363 = vadd.f32 %v362, 0.014752088
    %v364 = vmul.f32 %v348, %v363
    %v365 = vadd.f32 %v364, 0.112945676
    %v366 = vmul.f32 %v348, %v365
    %v367 = vadd.f32 %v366, 0.4994258
    %v368 = vmul.f32 %v348, %v367
    %v369 = vadd.f32 %v368, 1.0
    %v370 = vrcp.pop %v369
    %v371 = vmul.f32 %v369, %v370
    %v372 = vsub.f32 1.0, %v371
    %v373 = vmul.f32 %v370, %v372
    %v374 = vadd.f32 %v370, %v373
    %vm375 = vweird.f32 %v369
    %vm376 = vweird.f32 %v370
    %vm377 = vmor %vm375, %vm376
    %v378 = vsel %vm377, %v370, %v374
    %v379 = vand.u32 2147483647, %v369
    %vm380 = vcmp.eq.f32.partialorder %v379, 8.507059e+37
    %v381 = vand.u32 %v369, 2147483648
    %v382 = vor.u32 1.1754944e-38, %v381
    %v383 = vsel %vm380, %v382, %v378
    %v384 = vmul.f32 %v359, %v383
    %v385 = vmin.f32 %v384, 1.0
    %v386 = vmax.f32 %v385, -1.0
    %v387 = vadd.f32 %v346, 1.0
    %v388 = vadd.f32 %v386, 1.0
    %v389 = vmul.f32 %v303, %v387
    %v390 = vmul.f32 %v304, %v388
    %v391 = vpack.c.bf16 %v390, %v389
    %v392 = vld [vmem:[#allocation8] sm:$0xf]
    %v393 = vld [vmem:[#allocation8 + $0x4] sm:$0xf]
    %v394 = vld [vmem:[#allocation8 + $0x8] sm:$0xf]
    %v395 = vld [vmem:[#allocation8 + $0xc] sm:$0xf]
    %v396 = vld [vmem:[#allocation8 + $0x10] sm:$0xf]
    %v397 = vld [vmem:[#allocation8 + $0x14] sm:$0xf]
    %v398 = vld [vmem:[#allocation8 + $0x18] sm:$0xf]
    %v399 = vld [vmem:[#allocation8 + $0x1c] sm:$0xf]
    %v400 = vld [vmem:[#allocation8 + $0x20] sm:$0xf]
    %v401 = vld [vmem:[#allocation8 + $0x24] sm:$0xf]
    %v402 = vld [vmem:[#allocation8 + $0x28] sm:$0xf]
    %v403 = vld [vmem:[#allocation8 + $0x2c] sm:$0xf]
    %v404 = vld [vmem:[#allocation8 + $0x30] sm:$0xf]
    %v405 = vld [vmem:[#allocation8 + $0x34] sm:$0xf]
    %v406 = vld [vmem:[#allocation8 + $0x38] sm:$0xf]
    %v407 = vld [vmem:[#allocation8 + $0x3c] sm:$0xf]
    %v408 = vld [vmem:[%s6] sm:$0x1]
    %v410 = vperm.slane %v408, 0
    %v428 = vunpack.c.l.b16 %v392
    %v429 = vunpack.c.l.b16 %v393
    %v430 = vunpack.c.l.b16 %v394
    %v431 = vunpack.c.l.b16 %v395
    %v432 = vunpack.c.l.b16 %v396
    %v433 = vunpack.c.l.b16 %v397
    %v434 = vunpack.c.l.b16 %v398
    %v435 = vunpack.c.l.b16 %v399
    %v436 = vunpack.c.l.b16 %v400
    %v437 = vunpack.c.l.b16 %v401
    %v438 = vunpack.c.l.b16 %v402
    %v439 = vunpack.c.l.b16 %v403
    %v440 = vunpack.c.l.b16 %v404
    %v441 = vunpack.c.l.b16 %v405
    %v442 = vunpack.c.l.b16 %v406
    %v443 = vunpack.c.l.b16 %v407
    %v444 = vpack.c.b16 %v429, %v428
    %v445 = vpack.c.b16 %v431, %v430
    %v446 = vpack.c.b16 %v433, %v432
    %v447 = vpack.c.b16 %v435, %v434
    %v448 = vpack.c.b16 %v437, %v436
    %v449 = vpack.c.b16 %v439, %v438
    %v450 = vpack.c.b16 %v441, %v440
    %v451 = vpack.c.b16 %v443, %v442
    %460 = vmatpush.bf16.msra.mxu0 %v451
    %461 = vmatpush.bf16.msra.mxu0 %v450
    %462 = vmatpush.bf16.msra.mxu0 %v449
    %463 = vmatpush.bf16.msra.mxu0 %v448
    %464 = vmatpush.bf16.msra.mxu0 %v447
    %465 = vmatpush.bf16.msra.mxu0 %v446
    %466 = vmatpush.bf16.msra.mxu0 %v445
    %467 = vmatpush.bf16.msra.mxu0 %v444
    %468 = vmatmul.bf16.gmra.mxu0 %v391
    %v469 = vpop.f32.mrf.mxu0
    %v470 = vadd.f32 %v410, %v469
    %v471 = vpop.f32.mrf.mxu0
    %v472 = vadd.f32 %v410, %v471
    %473 = vdwg.mxu0
    %v474 = vmul.f32 %v470, 0.5
    %v475 = vmul.f32 %v472, 0.5
    %v476 = vmul.f32 %v470, 0.70710677
    %v477 = vmul.f32 %v472, 0.70710677
    %v478 = vmul.f32 %v476, %v476
    %v479 = vmin.f32 16.0, %v478
    %v480 = vmul.f32 %v479, 2.1237322e-06
    %v481 = vadd.f32 %v480, 0.00028619796
    %v482 = vmul.f32 %v479, %v481
    %v483 = vadd.f32 %v482, 0.0036580483
    %v484 = vmul.f32 %v479, %v483
    %v485 = vadd.f32 %v484, 0.05243302
    %v486 = vmul.f32 %v479, %v485
    %v487 = vadd.f32 %v486, 0.18741608
    %v488 = vmul.f32 %v479, %v487
    %v489 = vadd.f32 %v488, 1.1283791
    %v490 = vmul.f32 %v476, %v489
    %v491 = vmul.f32 %v479, 3.8918573e-05
    %v492 = vadd.f32 %v491, 0.001143296
    %v493 = vmul.f32 %v479, %v492
    %v494 = vadd.f32 %v493, 0.014752088
    %v495 = vmul.f32 %v479, %v494
    %v496 = vadd.f32 %v495, 0.112945676
    %v497 = vmul.f32 %v479, %v496
    %v498 = vadd.f32 %v497, 0.4994258
    %v499 = vmul.f32 %v479, %v498
    %v500 = vadd.f32 %v499, 1.0
    %v501 = vrcp.pop %v500
    %v502 = vmul.f32 %v500, %v501
    %v503 = vsub.f32 1.0, %v502
    %v504 = vmul.f32 %v501, %v503
    %v505 = vadd.f32 %v501, %v504
    %vm506 = vweird.f32 %v500
    %vm507 = vweird.f32 %v501
    %vm508 = vmor %vm506, %vm507
    %v509 = vsel %vm508, %v501, %v505
    %v510 = vand.u32 2147483647, %v500
    %vm511 = vcmp.eq.f32.partialorder %v510, 8.507059e+37
    %v512 = vand.u32 %v500, 2147483648
    %v513 = vor.u32 1.1754944e-38, %v512
    %v514 = vsel %vm511, %v513, %v509
    %v515 = vmul.f32 %v490, %v514
    %v516 = vmin.f32 %v515, 1.0
    %v517 = vmax.f32 %v516, -1.0
    %v518 = vmul.f32 %v477, %v477
    %v519 = vmin.f32 16.0, %v518
    %v520 = vmul.f32 %v519, 2.1237322e-06
    %v521 = vadd.f32 %v520, 0.00028619796
    %v522 = vmul.f32 %v519, %v521
    %v523 = vadd.f32 %v522, 0.0036580483
    %v524 = vmul.f32 %v519, %v523
    %v525 = vadd.f32 %v524, 0.05243302
    %v526 = vmul.f32 %v519, %v525
    %v527 = vadd.f32 %v526, 0.18741608
    %v528 = vmul.f32 %v519, %v527
    %v529 = vadd.f32 %v528, 1.1283791
    %v530 = vmul.f32 %v477, %v529
    %v531 = vmul.f32 %v519, 3.8918573e-05
    %v532 = vadd.f32 %v531, 0.001143296
    %v533 = vmul.f32 %v519, %v532
    %v534 = vadd.f32 %v533, 0.014752088
    %v535 = vmul.f32 %v519, %v534
    %v536 = vadd.f32 %v535, 0.112945676
    %v537 = vmul.f32 %v519, %v536
    %v538 = vadd.f32 %v537, 0.4994258
    %v539 = vmul.f32 %v519, %v538
    %v540 = vadd.f32 %v539, 1.0
    %v541 = vrcp.pop %v540
    %v542 = vmul.f32 %v540, %v541
    %v543 = vsub.f32 1.0, %v542
    %v544 = vmul.f32 %v541, %v543
    %v545 = vadd.f32 %v541, %v544
    %vm546 = vweird.f32 %v540
    %vm547 = vweird.f32 %v541
    %vm548 = vmor %vm546, %vm547
    %v549 = vsel %vm548, %v541, %v545
    %v550 = vand.u32 2147483647, %v540
    %vm551 = vcmp.eq.f32.partialorder %v550, 8.507059e+37
    %v552 = vand.u32 %v540, 2147483648
    %v553 = vor.u32 1.1754944e-38, %v552
    %v554 = vsel %vm551, %v553, %v549
    %v555 = vmul.f32 %v530, %v554
    %v556 = vmin.f32 %v555, 1.0
    %v557 = vmax.f32 %v556, -1.0
    %v558 = vadd.f32 %v517, 1.0
    %v559 = vadd.f32 %v557, 1.0
    %v560 = vmul.f32 %v474, %v558
    %v561 = vmul.f32 %v475, %v559
    %562 = vst [vmem:[#allocation10] sm:$0xff] %v560
    %563 = vst [vmem:[#allocation10 + $0x8] sm:$0xff] %v561
    // Predicated region
    $region46: #{tpu_custom_call.1} parent=1 // pred_check
      _
    $region47: #{tpu_custom_call.1} parent=1 // pred_check_branch
      %565 = sbr.rel (0) target = $region49
    $region48: #{tpu_custom_call.1} parent=1 // pred_region
      %567 = vsyncadd [#allocation4], 0
      %s568 = sshll.u32 [#allocation10], 4
      %s569 = int_to_ptr.vmem [resolvable:$true] %s568
      %s570 = sshll.u32 %s7, 4
      %s571 = int_to_ptr.hbm [resolvable:$true] %s570
      %576 = dma.vmem_to_hbm [thread:$0]  %s569, 256, %s571, [#allocation4], 128, 128, 8
    $region49: #{tpu_custom_call.1} parent=1 // pred_fallthru
      _
    // Predicated region
    $region50: #{tpu_custom_call.1} parent=1 // pred_check
      _
    $region51: #{tpu_custom_call.1} parent=1 // pred_check_branch
      %578 = sbr.rel (0) target = $region53
    $region52: #{tpu_custom_call.1} parent=1 // pred_region
      %580 = dma.done [#allocation4], 256
    $region53: #{tpu_custom_call.1} parent=1 // pred_fallthru
      _
    %581 = vsyncpa [#allocation3], 1
    %582 = vsyncpa [#allocation6], 1
    %583 = vsyncpa [#allocation9], 1
    %584 = vsyncpa [#allocation4], 1

// kernel: tpu_custom_call.1
$region0: #{tpu_custom_call.1}
  #allocation0 [shape = 'u32[]', space=smem, size = 0x4, offset = 0x4, fixed_abs, tag = 'smem constant byte address 0x4 - core index']
  #allocation1 [shape = 'u32[72,128]{1,0:T(1,128)}', space=vmem, size = 0x9000, scoped, tag = 'internal scratch']
  %s0 = inlined_call_operand.hbm [shape: f32[16,32], index: 0, kind: input, shape index: {}]
  %s1 = inlined_call_operand.hbm [shape: bf16[32,128], index: 1, kind: input, shape index: {}]
  %s2 = inlined_call_operand.vmem [shape: f32[1,128], index: 2, kind: input, shape index: {}]
  %s3 = inlined_call_operand.hbm [shape: bf16[128,128], index: 3, kind: input, shape index: {}]
  %s4 = inlined_call_operand.vmem [shape: f32[1,128], index: 4, kind: input, shape index: {}]
  %s5 = inlined_call_operand.hbm [shape: bf16[128,128], index: 5, kind: input, shape index: {}]
  %s6 = inlined_call_operand.vmem [shape: f32[1,128], index: 6, kind: input, shape index: {}]
  %s7 = inlined_call_operand.hbm [shape: f32[16,128], index: 7, kind: output, shape index: {}]
  %s8 = sld [smem:[#allocation0]]
  $region54: #{tpu_custom_call.1} parent=0
    _
  %s10 = ssub.s32 1, %s8
  %s11 = scalar_select 0, %s10, %s8
  $region1: #{tpu_custom_call.1} parent=0
    #allocation2 [shape = 'u8[8192]{0}', space=vmem, size = 0x2000, scoped, tag = 'input window, operand 0, single buffered']
    #allocation3 [shape = 's32[1]{0}', space=sflag, size = 0x4, scoped, tag = 'scoped memory for tpu_custom_call.1']
    #allocation4 [shape = 's32[1]{0}', space=sflag, size = 0x4, scoped, tag = 'scoped memory for tpu_custom_call.1']
    #allocation5 [shape = 'u8[8192]{0}', space=vmem, size = 0x2000, scoped, tag = 'input window, operand 1, single buffered']
    #allocation6 [shape = 's32[1]{0}', space=sflag, size = 0x4, scoped, tag = 'scoped memory for tpu_custom_call.1']
    #allocation7 [shape = 'u8[32768]{0}', space=vmem, size = 0x8000, scoped, tag = 'input window, operand 3, single buffered']
    #allocation8 [shape = 'u8[32768]{0}', space=vmem, size = 0x8000, scoped, tag = 'input window, operand 5, single buffered']
    #allocation9 [shape = 's32[1]{0}', space=sflag, size = 0x4, scoped, tag = 'scoped memory for tpu_custom_call.1']
    #allocation10 [shape = 'u8[8192]{0}', space=vmem, size = 0x2000, scoped, tag = 'output window, operand 0, single buffered']
    %12 = vsyncpa [#allocation3], 0
    %13 = vsyncpa [#allocation6], 0
    %14 = vsyncpa [#allocation9], 0
    %15 = vsyncpa [#allocation4], 0
    // Predicated region
    $region2: #{tpu_custom_call.1} parent=1 // pred_check
      _
    $region3: #{tpu_custom_call.1} parent=1 // pred_check_branch
      %17 = sbr.rel (0) target = $region5
    $region4: #{tpu_custom_call.1} parent=1 // pred_region
      %19 = vsyncadd [#allocation3], 0
      %s20 = sshll.u32 %s0, 4
      %s21 = int_to_ptr.hbm [resolvable:$true] %s20
      %s22 = sshll.u32 [#allocation2], 4
      %s23 = int_to_ptr.vmem [resolvable:$true] %s22
      %28 = dma.hbm_to_vmem [thread:$0]  %s21, 256, %s23, [#allocation3], 128, 128, 8
    $region5: #{tpu_custom_call.1} parent=1 // pred_fallthru
      _
    // Predicated region
    $region6: #{tpu_custom_call.1} parent=1 // pred_check
      _
    $region7: #{tpu_custom_call.1} parent=1 // pred_check_branch
      %30 = sbr.rel (0) target = $region9
    $region8: #{tpu_custom_call.1} parent=1 // pred_region
      %32 = vsyncadd [#allocation6], 0
      %s33 = sshll.u32 %s1, 4
      %s34 = int_to_ptr.hbm [resolvable:$true] %s33
      %s35 = sshll.u32 [#allocation5], 4
      %s36 = int_to_ptr.vmem [resolvable:$true] %s35
      %41 = dma.hbm_to_vmem [thread:$0]  %s34, 256, %s36, [#allocation6], 64, 64, 4
    $region9: #{tpu_custom_call.1} parent=1 // pred_fallthru
      _
    // Predicated region
    $region10: #{tpu_custom_call.1} parent=1 // pred_check
      _
    $region11: #{tpu_custom_call.1} parent=1 // pred_check_branch
      %43 = sbr.rel (0) target = $region13
    $region12: #{tpu_custom_call.1} parent=1 // pred_region
      _
    $region13: #{tpu_custom_call.1} parent=1 // pred_fallthru
      _
    // Predicated region
    $region14: #{tpu_custom_call.1} parent=1 // pred_check
      _
    $region15: #{tpu_custom_call.1} parent=1 // pred_check_branch
      %45 = sbr.rel (0) target = $region17
    $region16: #{tpu_custom_call.1} parent=1 // pred_region
      %47 = vsyncadd [#allocation6], 0
      %s48 = sshll.u32 %s3, 4
      %s49 = int_to_ptr.hbm [resolvable:$true] %s48
      %s50 = sshll.u32 [#allocation7], 4
      %s51 = int_to_ptr.vmem [resolvable:$true] %s50
      %56 = dma.hbm_to_vmem [thread:$0]  %s49, 1024, %s51, [#allocation6], 64, 64, 4
    $region17: #{tpu_custom_call.1} parent=1 // pred_fallthru
      _
    // Predicated region
    $region18: #{tpu_custom_call.1} parent=1 // pred_check
      _
    $region19: #{tpu_custom_call.1} parent=1 // pred_check_branch
      %58 = sbr.rel (0) target = $region21
    $region20: #{tpu_custom_call.1} parent=1 // pred_region
      _
    $region21: #{tpu_custom_call.1} parent=1 // pred_fallthru
      _
    // Predicated region
    $region22: #{tpu_custom_call.1} parent=1 // pred_check
      _
    $region23: #{tpu_custom_call.1} parent=1 // pred_check_branch
      %60 = sbr.rel (0) target = $region25
    $region24: #{tpu_custom_call.1} parent=1 // pred_region
      %62 = vsyncadd [#allocation9], 0
      %s63 = sshll.u32 %s5, 4
      %s64 = int_to_ptr.hbm [resolvable:$true] %s63
      %s65 = sshll.u32 [#allocation8], 4
      %s66 = int_to_ptr.vmem [resolvable:$true] %s65
      %71 = dma.hbm_to_vmem [thread:$0]  %s64, 1024, %s66, [#allocation9], 64, 64, 4
    $region25: #{tpu_custom_call.1} parent=1 // pred_fallthru
      _
    // Predicated region
    $region26: #{tpu_custom_call.1} parent=1 // pred_check
      _
    $region27: #{tpu_custom_call.1} parent=1 // pred_check_branch
      %73 = sbr.rel (0) target = $region29
    $region28: #{tpu_custom_call.1} parent=1 // pred_region
      _
    $region29: #{tpu_custom_call.1} parent=1 // pred_fallthru
      _
    // Predicated region
    $region30: #{tpu_custom_call.1} parent=1 // pred_check
      _
    $region31: #{tpu_custom_call.1} parent=1 // pred_check_branch
      %75 = sbr.rel (0) target = $region33
    $region32: #{tpu_custom_call.1} parent=1 // pred_region
      %77 = dma.done [#allocation3], 256
    $region33: #{tpu_custom_call.1} parent=1 // pred_fallthru
      _
    // Predicated region
    $region34: #{tpu_custom_call.1} parent=1 // pred_check
      _
    $region35: #{tpu_custom_call.1} parent=1 // pred_check_branch
      %79 = sbr.rel (0) target = $region37
    $region36: #{tpu_custom_call.1} parent=1 // pred_region
      %81 = dma.done [#allocation6], 256
    $region37: #{tpu_custom_call.1} parent=1 // pred_fallthru
      _
    // Predicated region
    $region38: #{tpu_custom_call.1} parent=1 // pred_check
      _
    $region39: #{tpu_custom_call.1} parent=1 // pred_check_branch
      %83 = sbr.rel (0) target = $region41
    $region40: #{tpu_custom_call.1} parent=1 // pred_region
      %85 = dma.done [#allocation6], 1024
    $region41: #{tpu_custom_call.1} parent=1 // pred_fallthru
      _
    // Predicated region
    $region42: #{tpu_custom_call.1} parent=1 // pred_check
      _
    $region43: #{tpu_custom_call.1} parent=1 // pred_check_branch
      %87 = sbr.rel (0) target = $region45
    $region44: #{tpu_custom_call.1} parent=1 // pred_region
      %89 = dma.done [#allocation9], 1024
    $region45: #{tpu_custom_call.1} parent=1 // pred_fallthru
      _
    %v91 = vld [vmem:[#allocation2] sm:$0xff]
    %v92 = vld [vmem:[#allocation2 + $0x8] sm:$0xff]
    %v93 = vpack.c.bf16 %v92, %v91
    %v94 = vld [vmem:[#allocation5] sm:$0xf]
    %v95 = vld [vmem:[#allocation5 + $0x4] sm:$0xf]
    %v96 = vld [vmem:[#allocation5 + $0x8] sm:$0xf]
    %v97 = vld [vmem:[#allocation5 + $0xc] sm:$0xf]
    %v98 = vld [vmem:[%s2] sm:$0x1]
    %v100 = vperm.slane %v98, 0
    %v106 = vunpack.c.l.b16 %v94
    %v107 = vunpack.c.l.b16 %v95
    %v108 = vunpack.c.l.b16 %v96
    %v109 = vunpack.c.l.b16 %v97
    %v110 = vpack.c.b16 %v107, %v106
    %v111 = vpack.c.b16 %v109, %v108
    %vm114 = vcmask 261120
    %v116 = vsel %vm114, %v93, 0
    %118 = vmatpush.bf16.msra.mxu0 0
    %119 = vmatpush.bf16.msra.mxu0 0
    %120 = vmatpush.bf16.msra.mxu0 0
    %121 = vmatpush.bf16.msra.mxu0 0
    %122 = vmatpush.bf16.msra.mxu0 0
    %123 = vmatpush.bf16.msra.mxu0 0
    %124 = vmatpush.bf16.msra.mxu0 %v111
    %125 = vmatpush.bf16.msra.mxu0 %v110
    %126 = vmatmul.bf16.gmra.mxu0 %v116
    %v127 = vpop.f32.mrf.mxu0
    %v128 = vadd.f32 %v100, %v127
    %v129 = vpop.f32.mrf.mxu0
    %v130 = vadd.f32 %v100, %v129
    %131 = vdwg.mxu0
    %v132 = vmul.f32 %v128, 0.5
    %v133 = vmul.f32 %v130, 0.5
    %v134 = vmul.f32 %v128, 0.70710677
    %v135 = vmul.f32 %v130, 0.70710677
    %v136 = vmul.f32 %v134, %v134
    %v137 = vmin.f32 16.0, %v136
    %v138 = vmul.f32 %v137, 2.1237322e-06
    %v139 = vadd.f32 %v138, 0.00028619796
    %v140 = vmul.f32 %v137, %v139
    %v141 = vadd.f32 %v140, 0.0036580483
    %v142 = vmul.f32 %v137, %v141
    %v143 = vadd.f32 %v142, 0.05243302
    %v144 = vmul.f32 %v137, %v143
    %v145 = vadd.f32 %v144, 0.18741608
    %v146 = vmul.f32 %v137, %v145
    %v147 = vadd.f32 %v146, 1.1283791
    %v148 = vmul.f32 %v134, %v147
    %v149 = vmul.f32 %v137, 3.8918573e-05
    %v150 = vadd.f32 %v149, 0.001143296
    %v151 = vmul.f32 %v137, %v150
    %v152 = vadd.f32 %v151, 0.014752088
    %v153 = vmul.f32 %v137, %v152
    %v154 = vadd.f32 %v153, 0.112945676
    %v155 = vmul.f32 %v137, %v154
    %v156 = vadd.f32 %v155, 0.4994258
    %v157 = vmul.f32 %v137, %v156
    %v158 = vadd.f32 %v157, 1.0
    %v159 = vrcp.pop %v158
    %v160 = vmul.f32 %v158, %v159
    %v161 = vsub.f32 1.0, %v160
    %v162 = vmul.f32 %v159, %v161
    %v163 = vadd.f32 %v159, %v162
    %vm164 = vweird.f32 %v158
    %vm165 = vweird.f32 %v159
    %vm166 = vmor %vm164, %vm165
    %v167 = vsel %vm166, %v159, %v163
    %v168 = vand.u32 2147483647, %v158
    %vm169 = vcmp.eq.f32.partialorder %v168, 8.507059e+37
    %v170 = vand.u32 %v158, 2147483648
    %v171 = vor.u32 1.1754944e-38, %v170
    %v172 = vsel %vm169, %v171, %v167
    %v173 = vmul.f32 %v148, %v172
    %v174 = vmin.f32 %v173, 1.0
    %v175 = vmax.f32 %v174, -1.0
    %v176 = vmul.f32 %v135, %v135
    %v177 = vmin.f32 16.0, %v176
    %v178 = vmul.f32 %v177, 2.1237322e-06
    %v179 = vadd.f32 %v178, 0.00028619796
    %v180 = vmul.f32 %v177, %v179
    %v181 = vadd.f32 %v180, 0.0036580483
    %v182 = vmul.f32 %v177, %v181
    %v183 = vadd.f32 %v182, 0.05243302
    %v184 = vmul.f32 %v177, %v183
    %v185 = vadd.f32 %v184, 0.18741608
    %v186 = vmul.f32 %v177, %v185
    %v187 = vadd.f32 %v186, 1.1283791
    %v188 = vmul.f32 %v135, %v187
    %v189 = vmul.f32 %v177, 3.8918573e-05
    %v190 = vadd.f32 %v189, 0.001143296
    %v191 = vmul.f32 %v177, %v190
    %v192 = vadd.f32 %v191, 0.014752088
    %v193 = vmul.f32 %v177, %v192
    %v194 = vadd.f32 %v193, 0.112945676
    %v195 = vmul.f32 %v177, %v194
    %v196 = vadd.f32 %v195, 0.4994258
    %v197 = vmul.f32 %v177, %v196
    %v198 = vadd.f32 %v197, 1.0
    %v199 = vrcp.pop %v198
    %v200 = vmul.f32 %v198, %v199
    %v201 = vsub.f32 1.0, %v200
    %v202 = vmul.f32 %v199, %v201
    %v203 = vadd.f32 %v199, %v202
    %vm204 = vweird.f32 %v198
    %vm205 = vweird.f32 %v199
    %vm206 = vmor %vm204, %vm205
    %v207 = vsel %vm206, %v199, %v203
    %v208 = vand.u32 2147483647, %v198
    %vm209 = vcmp.eq.f32.partialorder %v208, 8.507059e+37
    %v210 = vand.u32 %v198, 2147483648
    %v211 = vor.u32 1.1754944e-38, %v210
    %v212 = vsel %vm209, %v211, %v207
    %v213 = vmul.f32 %v188, %v212
    %v214 = vmin.f32 %v213, 1.0
    %v215 = vmax.f32 %v214, -1.0
    %v216 = vadd.f32 %v175, 1.0
    %v217 = vadd.f32 %v215, 1.0
    %v218 = vmul.f32 %v132, %v216
    %v219 = vmul.f32 %v133, %v217
    %v220 = vpack.c.bf16 %v219, %v218
    %v221 = vld [vmem:[#allocation7] sm:$0xf]
    %v222 = vld [vmem:[#allocation7 + $0x4] sm:$0xf]
    %v223 = vld [vmem:[#allocation7 + $0x8] sm:$0xf]
    %v224 = vld [vmem:[#allocation7 + $0xc] sm:$0xf]
    %v225 = vld [vmem:[#allocation7 + $0x10] sm:$0xf]
    %v226 = vld [vmem:[#allocation7 + $0x14] sm:$0xf]
    %v227 = vld [vmem:[#allocation7 + $0x18] sm:$0xf]
    %v228 = vld [vmem:[#allocation7 + $0x1c] sm:$0xf]
    %v229 = vld [vmem:[#allocation7 + $0x20] sm:$0xf]
    %v230 = vld [vmem:[#allocation7 + $0x24] sm:$0xf]
    %v231 = vld [vmem:[#allocation7 + $0x28] sm:$0xf]
    %v232 = vld [vmem:[#allocation7 + $0x2c] sm:$0xf]
    %v233 = vld [vmem:[#allocation7 + $0x30] sm:$0xf]
    %v234 = vld [vmem:[#allocation7 + $0x34] sm:$0xf]
    %v235 = vld [vmem:[#allocation7 + $0x38] sm:$0xf]
    %v236 = vld [vmem:[#allocation7 + $0x3c] sm:$0xf]
    %v237 = vld [vmem:[%s4] sm:$0x1]
    %v239 = vperm.slane %v237, 0
    %v257 = vunpack.c.l.b16 %v221
    %v258 = vunpack.c.l.b16 %v222
    %v259 = vunpack.c.l.b16 %v223
    %v260 = vunpack.c.l.b16 %v224
    %v261 = vunpack.c.l.b16 %v225
    %v262 = vunpack.c.l.b16 %v226
    %v263 = vunpack.c.l.b16 %v227
    %v264 = vunpack.c.l.b16 %v228
    %v265 = vunpack.c.l.b16 %v229
    %v266 = vunpack.c.l.b16 %v230
    %v267 = vunpack.c.l.b16 %v231
    %v268 = vunpack.c.l.b16 %v232
    %v269 = vunpack.c.l.b16 %v233
    %v270 = vunpack.c.l.b16 %v234
    %v271 = vunpack.c.l.b16 %v235
    %v272 = vunpack.c.l.b16 %v236
    %v273 = vpack.c.b16 %v258, %v257
    %v274 = vpack.c.b16 %v260, %v259
    %v275 = vpack.c.b16 %v262, %v261
    %v276 = vpack.c.b16 %v264, %v263
    %v277 = vpack.c.b16 %v266, %v265
    %v278 = vpack.c.b16 %v268, %v267
    %v279 = vpack.c.b16 %v270, %v269
    %v280 = vpack.c.b16 %v272, %v271
    %289 = vmatpush.bf16.msra.mxu0 %v280
    %290 = vmatpush.bf16.msra.mxu0 %v279
    %291 = vmatpush.bf16.msra.mxu0 %v278
    %292 = vmatpush.bf16.msra.mxu0 %v277
    %293 = vmatpush.bf16.msra.mxu0 %v276
    %294 = vmatpush.bf16.msra.mxu0 %v275
    %295 = vmatpush.bf16.msra.mxu0 %v274
    %296 = vmatpush.bf16.msra.mxu0 %v273
    %297 = vmatmul.bf16.gmra.mxu0 %v220
    %v298 = vpop.f32.mrf.mxu0
    %v299 = vadd.f32 %v239, %v298
    %v300 = vpop.f32.mrf.mxu0
    %v301 = vadd.f32 %v239, %v300
    %302 = vdwg.mxu0
    %v303 = vmul.f32 %v299, 0.5
    %v304 = vmul.f32 %v301, 0.5
    %v305 = vmul.f32 %v299, 0.70710677
    %v306 = vmul.f32 %v301, 0.70710677
    %v307 = vmul.f32 %v305, %v305
    %v308 = vmin.f32 16.0, %v307
    %v309 = vmul.f32 %v308, 2.1237322e-06
    %v310 = vadd.f32 %v309, 0.00028619796
    %v311 = vmul.f32 %v308, %v310
    %v312 = vadd.f32 %v311, 0.0036580483
    %v313 = vmul.f32 %v308, %v312
    %v314 = vadd.f32 %v313, 0.05243302
    %v315 = vmul.f32 %v308, %v314
    %v316 = vadd.f32 %v315, 0.18741608
    %v317 = vmul.f32 %v308, %v316
    %v318 = vadd.f32 %v317, 1.1283791
    %v319 = vmul.f32 %v305, %v318
    %v320 = vmul.f32 %v308, 3.8918573e-05
    %v321 = vadd.f32 %v320, 0.001143296
    %v322 = vmul.f32 %v308, %v321
    %v323 = vadd.f32 %v322, 0.014752088
    %v324 = vmul.f32 %v308, %v323
    %v325 = vadd.f32 %v324, 0.112945676
    %v326 = vmul.f32 %v308, %v325
    %v327 = vadd.f32 %v326, 0.4994258
    %v328 = vmul.f32 %v308, %v327
    %v329 = vadd.f32 %v328, 1.0
    %v330 = vrcp.pop %v329
    %v331 = vmul.f32 %v329, %v330
    %v332 = vsub.f32 1.0, %v331
    %v333 = vmul.f32 %v330, %v332
    %v334 = vadd.f32 %v330, %v333
    %vm335 = vweird.f32 %v329
    %vm336 = vweird.f32 %v330
    %vm337 = vmor %vm335, %vm336
    %v338 = vsel %vm337, %v330, %v334
    %v339 = vand.u32 2147483647, %v329
    %vm340 = vcmp.eq.f32.partialorder %v339, 8.507059e+37
    %v341 = vand.u32 %v329, 2147483648
    %v342 = vor.u32 1.1754944e-38, %v341
    %v343 = vsel %vm340, %v342, %v338
    %v344 = vmul.f32 %v319, %v343
    %v345 = vmin.f32 %v344, 1.0
    %v346 = vmax.f32 %v345, -1.0
    %v347 = vmul.f32 %v306, %v306
    %v348 = vmin.f32 16.0, %v347
    %v349 = vmul.f32 %v348, 2.1237322e-06
    %v350 = vadd.f32 %v349, 0.00028619796
    %v351 = vmul.f32 %v348, %v350
    %v352 = vadd.f32 %v351, 0.0036580483
    %v353 = vmul.f32 %v348, %v352
    %v354 = vadd.f32 %v353, 0.05243302
    %v355 = vmul.f32 %v348, %v354
    %v356 = vadd.f32 %v355, 0.18741608
    %v357 = vmul.f32 %v348, %v356
    %v358 = vadd.f32 %v357, 1.1283791
    %v359 = vmul.f32 %v306, %v358
    %v360 = vmul.f32 %v348, 3.8918573e-05
    %v361 = vadd.f32 %v360, 0.001143296
    %v362 = vmul.f32 %v348, %v361
    %v363 = vadd.f32 %v362, 0.014752088
    %v364 = vmul.f32 %v348, %v363
    %v365 = vadd.f32 %v364, 0.112945676
    %v366 = vmul.f32 %v348, %v365
    %v367 = vadd.f32 %v366, 0.4994258
    %v368 = vmul.f32 %v348, %v367
    %v369 = vadd.f32 %v368, 1.0
    %v370 = vrcp.pop %v369
    %v371 = vmul.f32 %v369, %v370
    %v372 = vsub.f32 1.0, %v371
    %v373 = vmul.f32 %v370, %v372
    %v374 = vadd.f32 %v370, %v373
    %vm375 = vweird.f32 %v369
    %vm376 = vweird.f32 %v370
    %vm377 = vmor %vm375, %vm376
    %v378 = vsel %vm377, %v370, %v374
    %v379 = vand.u32 2147483647, %v369
    %vm380 = vcmp.eq.f32.partialorder %v379, 8.507059e+37
    %v381 = vand.u32 %v369, 2147483648
    %v382 = vor.u32 1.1754944e-38, %v381
    %v383 = vsel %vm380, %v382, %v378
    %v384 = vmul.f32 %v359, %v383
    %v385 = vmin.f32 %v384, 1.0
    %v386 = vmax.f32 %v385, -1.0
    %v387 = vadd.f32 %v346, 1.0
    %v388 = vadd.f32 %v386, 1.0
    %v389 = vmul.f32 %v303, %v387
    %v390 = vmul.f32 %v304, %v388
    %v391 = vpack.c.bf16 %v390, %v389
    %v392 = vld [vmem:[#allocation8] sm:$0xf]
    %v393 = vld [vmem:[#allocation8 + $0x4] sm:$0xf]
    %v394 = vld [vmem:[#allocation8 + $0x8] sm:$0xf]
    %v395 = vld [vmem:[#allocation8 + $0xc] sm:$0xf]
    %v396 = vld [vmem:[#allocation8 + $0x10] sm:$0xf]
    %v397 = vld [vmem:[#allocation8 + $0x14] sm:$0xf]
    %v398 = vld [vmem:[#allocation8 + $0x18] sm:$0xf]
    %v399 = vld [vmem:[#allocation8 + $0x1c] sm:$0xf]
    %v400 = vld [vmem:[#allocation8 + $0x20] sm:$0xf]
    %v401 = vld [vmem:[#allocation8 + $0x24] sm:$0xf]
    %v402 = vld [vmem:[#allocation8 + $0x28] sm:$0xf]
    %v403 = vld [vmem:[#allocation8 + $0x2c] sm:$0xf]
    %v404 = vld [vmem:[#allocation8 + $0x30] sm:$0xf]
    %v405 = vld [vmem:[#allocation8 + $0x34] sm:$0xf]
    %v406 = vld [vmem:[#allocation8 + $0x38] sm:$0xf]
    %v407 = vld [vmem:[#allocation8 + $0x3c] sm:$0xf]
    %v408 = vld [vmem:[%s6] sm:$0x1]
    %v410 = vperm.slane %v408, 0
    %v428 = vunpack.c.l.b16 %v392
    %v429 = vunpack.c.l.b16 %v393
    %v430 = vunpack.c.l.b16 %v394
    %v431 = vunpack.c.l.b16 %v395
    %v432 = vunpack.c.l.b16 %v396
    %v433 = vunpack.c.l.b16 %v397
    %v434 = vunpack.c.l.b16 %v398
    %v435 = vunpack.c.l.b16 %v399
    %v436 = vunpack.c.l.b16 %v400
    %v437 = vunpack.c.l.b16 %v401
    %v438 = vunpack.c.l.b16 %v402
    %v439 = vunpack.c.l.b16 %v403
    %v440 = vunpack.c.l.b16 %v404
    %v441 = vunpack.c.l.b16 %v405
    %v442 = vunpack.c.l.b16 %v406
    %v443 = vunpack.c.l.b16 %v407
    %v444 = vpack.c.b16 %v429, %v428
    %v445 = vpack.c.b16 %v431, %v430
    %v446 = vpack.c.b16 %v433, %v432
    %v447 = vpack.c.b16 %v435, %v434
    %v448 = vpack.c.b16 %v437, %v436
    %v449 = vpack.c.b16 %v439, %v438
    %v450 = vpack.c.b16 %v441, %v440
    %v451 = vpack.c.b16 %v443, %v442
    %460 = vmatpush.bf16.msra.mxu0 %v451
    %461 = vmatpush.bf16.msra.mxu0 %v450
    %462 = vmatpush.bf16.msra.mxu0 %v449
    %463 = vmatpush.bf16.msra.mxu0 %v448
    %464 = vmatpush.bf16.msra.mxu0 %v447
    %465 = vmatpush.bf16.msra.mxu0 %v446
    %466 = vmatpush.bf16.msra.mxu0 %v445
    %467 = vmatpush.bf16.msra.mxu0 %v444
    %468 = vmatmul.bf16.gmra.mxu0 %v391
    %v469 = vpop.f32.mrf.mxu0
    %v470 = vadd.f32 %v410, %v469
    %v471 = vpop.f32.mrf.mxu0
    %v472 = vadd.f32 %v410, %v471
    %473 = vdwg.mxu0
    %v474 = vmul.f32 %v470, 0.5
    %v475 = vmul.f32 %v472, 0.5
    %v476 = vmul.f32 %v470, 0.70710677
    %v477 = vmul.f32 %v472, 0.70710677
    %v478 = vmul.f32 %v476, %v476
    %v479 = vmin.f32 16.0, %v478
    %v480 = vmul.f32 %v479, 2.1237322e-06
    %v481 = vadd.f32 %v480, 0.00028619796
    %v482 = vmul.f32 %v479, %v481
    %v483 = vadd.f32 %v482, 0.0036580483
    %v484 = vmul.f32 %v479, %v483
    %v485 = vadd.f32 %v484, 0.05243302
    %v486 = vmul.f32 %v479, %v485
    %v487 = vadd.f32 %v486, 0.18741608
    %v488 = vmul.f32 %v479, %v487
    %v489 = vadd.f32 %v488, 1.1283791
    %v490 = vmul.f32 %v476, %v489
    %v491 = vmul.f32 %v479, 3.8918573e-05
    %v492 = vadd.f32 %v491, 0.001143296
    %v493 = vmul.f32 %v479, %v492
    %v494 = vadd.f32 %v493, 0.014752088
    %v495 = vmul.f32 %v479, %v494
    %v496 = vadd.f32 %v495, 0.112945676
    %v497 = vmul.f32 %v479, %v496
    %v498 = vadd.f32 %v497, 0.4994258
    %v499 = vmul.f32 %v479, %v498
    %v500 = vadd.f32 %v499, 1.0
    %v501 = vrcp.pop %v500
    %v502 = vmul.f32 %v500, %v501
    %v503 = vsub.f32 1.0, %v502
    %v504 = vmul.f32 %v501, %v503
    %v505 = vadd.f32 %v501, %v504
    %vm506 = vweird.f32 %v500
    %vm507 = vweird.f32 %v501
    %vm508 = vmor %vm506, %vm507
    %v509 = vsel %vm508, %v501, %v505
    %v510 = vand.u32 2147483647, %v500
    %vm511 = vcmp.eq.f32.partialorder %v510, 8.507059e+37
    %v512 = vand.u32 %v500, 2147483648
    %v513 = vor.u32 1.1754944e-38, %v512
    %v514 = vsel %vm511, %v513, %v509
    %v515 = vmul.f32 %v490, %v514
    %v516 = vmin.f32 %v515, 1.0
    %v517 = vmax.f32 %v516, -1.0
    %v518 = vmul.f32 %v477, %v477
    %v519 = vmin.f32 16.0, %v518
    %v520 = vmul.f32 %v519, 2.1237322e-06
    %v521 = vadd.f32 %v520, 0.00028619796
    %v522 = vmul.f32 %v519, %v521
    %v523 = vadd.f32 %v522, 0.0036580483
    %v524 = vmul.f32 %v519, %v523
    %v525 = vadd.f32 %v524, 0.05243302
    %v526 = vmul.f32 %v519, %v525
    %v527 = vadd.f32 %v526, 0.18741608
    %v528 = vmul.f32 %v519, %v527
    %v529 = vadd.f32 %v528, 1.1283791
    %v530 = vmul.f32 %v477, %v529
    %v531 = vmul.f32 %v519, 3.8918573e-05
    %v532 = vadd.f32 %v531, 0.001143296
    %v533 = vmul.f32 %v519, %v532
    %v534 = vadd.f32 %v533, 0.014752088
    %v535 = vmul.f32 %v519, %v534
    %v536 = vadd.f32 %v535, 0.112945676
    %v537 = vmul.f32 %v519, %v536
    %v538 = vadd.f32 %v537, 0.4994258
    %v539 = vmul.f32 %v519, %v538
    %v540 = vadd.f32 %v539, 1.0
    %v541 = vrcp.pop %v540
    %v542 = vmul.f32 %v540, %v541
    %v543 = vsub.f32 1.0, %v542
    %v544 = vmul.f32 %v541, %v543
    %v545 = vadd.f32 %v541, %v544
    %vm546 = vweird.f32 %v540
    %vm547 = vweird.f32 %v541
    %vm548 = vmor %vm546, %vm547
    %v549 = vsel %vm548, %v541, %v545
    %v550 = vand.u32 2147483647, %v540
    %vm551 = vcmp.eq.f32.partialorder %v550, 8.507059e+37
    %v552 = vand.u32 %v540, 2147483648
    %v553 = vor.u32 1.1754944e-38, %v552
    %v554 = vsel %vm551, %v553, %v549
    %v555 = vmul.f32 %v530, %v554
    %v556 = vmin.f32 %v555, 1.0
    %v557 = vmax.f32 %v556, -1.0
    %v558 = vadd.f32 %v517, 1.0
    %v559 = vadd.f32 %v557, 1.0
    %v560 = vmul.f32 %v474, %v558
    %v561 = vmul.f32 %v475, %v559
    %562 = vst [vmem:[#allocation10] sm:$0xff] %v560
    %563 = vst [vmem:[#allocation10 + $0x8] sm:$0xff] %v561
    // Predicated region
    $region46: #{tpu_custom_call.1} parent=1 // pred_check
      _
    $region47: #{tpu_custom_call.1} parent=1 // pred_check_branch
      %565 = sbr.rel (0) target = $region49
    $region48: #{tpu_custom_call.1} parent=1 // pred_region
      %567 = vsyncadd [#allocation4], 0
      %s568 = sshll.u32 [#allocation10], 4
      %s569 = int_to_ptr.vmem [resolvable:$true] %s568
      %s570 = sshll.u32 %s7, 4
      %s571 = int_to_ptr.hbm [resolvable:$true] %s570
      %576 = dma.vmem_to_hbm [thread:$0]  %s569, 256, %s571, [#allocation4], 128, 128, 8
    $region49: #{tpu_custom_call.1} parent=1 // pred_fallthru
      _
    // Predicated region
    $region50: #{tpu_custom_call.1} parent=1 // pred_check
      _
    $region51: #{tpu_custom_call.1} parent=1 // pred_check_branch
      %578 = sbr.rel (0) target = $region53
    $region52: #{tpu_custom_call.1} parent=1 // pred_region
      %580 = dma.done [#allocation4], 256
    $region53: #{tpu_custom_call.1} parent=1 // pred_fallthru
      _
    %581 = vsyncpa [#allocation3], 1
    %582 = vsyncpa [#allocation6], 1
    %583 = vsyncpa [#allocation9], 1
    %584 = vsyncpa [#allocation4], 1

</llo_original>
